<compile_context>
chip_gen: v5e
topology: v5e:2x2
jax: 0.10.0
libtpu: 0.0.40
codegen_flags: <defaults>
</compile_context>

<pallas_src>
import math

import jax
import jax.numpy as jnp
from jax import lax
from jax.experimental import pallas as pl
from jax.experimental.pallas import tpu as pltpu

# Small, module-consistent sizes (embed_dim divisible by num_heads).
EMBED_DIM = 32
NUM_HEADS = 4
OUTPUT_DIM = 32
HEAD_DIM = EMBED_DIM // NUM_HEADS


def _mha_kernel(q_ref, k_ref, v_ref,
                wq_ref, bq_ref, wk_ref, bk_ref, wv_ref, bv_ref,
                wo_ref, bo_ref,
                out_ref, attn_ref):
    """Single fused step: the whole batch is processed in one invocation.

    q_ref: (L, N, E)   k_ref/v_ref: (S, N, E)
    w*_ref: (E, E) / (OUTPUT_DIM, E)   b*_ref: (1, E) / (1, OUTPUT_DIM)
    out_ref: (L, N, OUTPUT_DIM)        attn_ref: (N, L, S)
    wq/bq arrive pre-scaled by 1/sqrt(HEAD_DIM) (folded in the wrapper).
    """
    L, N, E = q_ref.shape
    S = k_ref.shape[0]

    # Weights loaded once, shared across the (static) batch loop.
    wq = wq_ref[...]; bq = bq_ref[...]
    wk = wk_ref[...]; bk = bk_ref[...]
    wv = wv_ref[...]; bv = bv_ref[...]
    wo = wo_ref[...]; bo = bo_ref[...]

    # Per-head full-width lane masks (trace-time constants via iota): every
    # per-head contraction runs at K=E with zero lanes contributing nothing,
    # so no sub-128-lane slices / lane relayouts are ever materialized.
    lane = lax.broadcasted_iota(jnp.int32, (1, E), 1)
    head_masks = [
        ((lane >= h * HEAD_DIM) & (lane < (h + 1) * HEAD_DIM)).astype(jnp.float32)
        for h in range(NUM_HEADS)
    ]

    def rowsT(x, w):
        # nn.Linear-style contraction: x @ w.T with f32 accumulation.
        return lax.dot_general(x, w, (((1,), (1,)), ((), ())),
                               preferred_element_type=jnp.float32)

    # Static (fully unrolled) loop over the fused batch — all math below is
    # plain 2-D so each op is a single MXU/VPU/EUP op the LLO can interleave.
    for n in range(N):
        qn = q_ref[:, n, :]          # (L, E)
        kn = k_ref[:, n, :]          # (S, E)
        vn = v_ref[:, n, :]          # (S, E)

        qp = rowsT(qn, wq) + bq      # query scale already folded into wq/bq
        kp = rowsT(kn, wk) + bk
        vp = rowsT(vn, wv) + bv

        ctx = jnp.zeros((L, E), jnp.float32)
        attn_acc = jnp.zeros((L, S), jnp.float32)

        for h in range(NUM_HEADS):
            m_h = head_masks[h]                        # (1, E)
            # Masked full-width contraction == per-head scores (K = E).
            s = rowsT(qp * m_h, kp)                    # (L, S)
            mx = jnp.max(s, axis=-1, keepdims=True)
            p = jnp.exp(s - mx)
            a = p / jnp.sum(p, axis=-1, keepdims=True)   # exact softmax (1e-5 tol)
            attn_acc = attn_acc + a
            # Head context lands in its own lane band of the full-width ctx.
            ctx = ctx + jnp.dot(a, vp, preferred_element_type=jnp.float32) * m_h

        # Single full-width output projection (hoisted out of the head loop).
        out = rowsT(ctx, wo) + bo                      # (L, OUTPUT_DIM), K = E
        out_ref[:, n, :] = out.astype(out_ref.dtype)
        # Averaged attention weights over heads (PyTorch need_weights=True).
        attn_ref[n, :, :] = (attn_acc * (1.0 / NUM_HEADS)).astype(attn_ref.dtype)


def cross_modal_attention(q, k, v, params):
    """q: (L, N, E), k/v: (S, N, E)  ->  (x: (L, N, OUTPUT_DIM), attn: (N, L, S))"""
    wq, bq, wk, bk, wv, bv, wo, bo = params
    L, N, E = q.shape
    S = k.shape[0]

    # Fold the 1/sqrt(head_dim) query scaling into the q projection: free at
    # trace time, removes per-head multiplies from the kernel.
    scale = 1.0 / math.sqrt(HEAD_DIM)
    wq_s = (wq * scale).astype(wq.dtype)
    bq_s = (bq * scale).reshape(1, E).astype(bq.dtype)
    bk2 = bk.reshape(1, E)
    bv2 = bv.reshape(1, E)
    bo2 = bo.reshape(1, OUTPUT_DIM)

    # Advisory cost so XLA does not serialize surrounding ops around this
    # cheap custom call.
    flops = N * (3 * 2 * L * E * E                       # q/k/v projections
                 + NUM_HEADS * 2 * (2 * L * S * E)       # scores + ctx (K=E)
                 + 2 * L * E * OUTPUT_DIM)               # output projection
    transcendentals = N * NUM_HEADS * L * S              # exp
    bytes_io = 4 * (q.size + k.size + v.size
                    + 3 * (E * E + E) + OUTPUT_DIM * E + OUTPUT_DIM
                    + L * N * OUTPUT_DIM + N * L * S)

    def full(shape):
        rank = len(shape)
        return pl.BlockSpec(shape, lambda i, _r=rank: (0,) * _r)

    out, attn = pl.pallas_call(
        _mha_kernel,
        out_shape=(
            jax.ShapeDtypeStruct((L, N, OUTPUT_DIM), q.dtype),
            jax.ShapeDtypeStruct((N, L, S), jnp.float32),
        ),
        grid=(1,),  # fused: whole (tiny) batch in one step, one contiguous DMA per array
        in_specs=[
            full((L, N, E)), full((S, N, E)), full((S, N, E)),
            full((E, E)), full((1, E)),
            full((E, E)), full((1, E)),
            full((E, E)), full((1, E)),
            full((OUTPUT_DIM, E)), full((1, OUTPUT_DIM)),
        ],
        out_specs=(
            full((L, N, OUTPUT_DIM)),   # seq-first output written directly
            full((N, L, S)),
        ),
        compiler_params=pltpu.CompilerParams(
            dimension_semantics=("arbitrary",)),
        cost_estimate=pl.CostEstimate(
            flops=flops, transcendentals=transcendentals,
            bytes_accessed=bytes_io),
    )(q, k, v, wq_s, bq_s, wk, bk2, wv, bv2, wo, bo2)

    return out, attn


def reference(q, k, v, params):
    """Pure-JAX reference matching F.multi_head_attention_forward semantics."""
    wq, bq, wk, bk, wv, bv, wo, bo = params
    L, N, E = q.shape
    S = k.shape[0]
    H, d = NUM_HEADS, HEAD_DIM

    qp = q @ wq.T + bq  # (L, N, E)
    kp = k @ wk.T + bk
    vp = v @ wv.T + bv

    qh = qp.reshape(L, N, H, d).transpose(1, 2, 0, 3)  # (N, H, L, d)
    kh = kp.reshape(S, N, H, d).transpose(1, 2, 0, 3)  # (N, H, S, d)
    vh = vp.reshape(S, N, H, d).transpose(1, 2, 0, 3)  # (N, H, S, d)

    s = jnp.einsum('nhld,nhsd->nhls', qh, kh) / math.sqrt(d)
    a = jax.nn.softmax(s, axis=-1)
    ctx = jnp.einsum('nhls,nhsd->nhld', a, vh)            # (N, H, L, d)
    ctx = ctx.transpose(2, 0, 1, 3).reshape(L, N, E)      # (L, N, E)
    out = ctx @ wo.T + bo                                 # (L, N, OUTPUT_DIM)
    return out, a.mean(axis=1)                            # attn: (N, L, S)


if __name__ == "__main__":
    L, S, N = 8, 8, 2
    E, Eo = EMBED_DIM, OUTPUT_DIM

    key = jax.random.PRNGKey(0)
    ks = jax.random.split(key, 11)

    q = jax.random.normal(ks[0], (L, N, E), jnp.float32)
    k = jax.random.normal(ks[1], (S, N, E), jnp.float32)
    v = jax.random.normal(ks[2], (S, N, E), jnp.float32)

    # Deterministic synthetic parameters (shapes per nn.Linear in __init__).
    wq = jax.random.normal(ks[3], (E, E), jnp.float32) * 0.05
    bq = jax.random.normal(ks[4], (E,), jnp.float32) * 0.01
    wk = jax.random.normal(ks[5], (E, E), jnp.float32) * 0.05
    bk = jax.random.normal(ks[6], (E,), jnp.float32) * 0.01
    wv = jax.random.normal(ks[7], (E, E), jnp.float32) * 0.05
    bv = jax.random.normal(ks[8], (E,), jnp.float32) * 0.01
    wo = jax.random.normal(ks[9], (Eo, E), jnp.float32) * 0.05
    bo = jax.random.normal(ks[10], (Eo,), jnp.float32) * 0.01
    params = (wq, bq, wk, bk, wv, bv, wo, bo)

    out, attn = cross_modal_attention(q, k, v, params)
    out, attn = jax.block_until_ready((out, attn))

    ref_out, ref_attn = reference(q, k, v, params)
    assert out.shape == (L, N, Eo) and attn.shape == (N, L, S)
    assert jnp.allclose(out, ref_out, atol=1e-4, rtol=1e-4), "output mismatch"
    assert jnp.allclose(attn, ref_attn, atol=1e-5, rtol=1e-5), "attn mismatch"

    print("KERNEL_OK")
</pallas_src>

<mosaic_0001>
module attributes {stable_mosaic.version = 11 : i64} {
  func.func @_mha_kernel(%arg0: i32, %arg1: memref<8x2x32xf32, #tpu.memory_space<vmem>>, %arg2: memref<8x2x32xf32, #tpu.memory_space<vmem>>, %arg3: memref<8x2x32xf32, #tpu.memory_space<vmem>>, %arg4: memref<32x32xf32, #tpu.memory_space<vmem>>, %arg5: memref<1x32xf32, #tpu.memory_space<vmem>>, %arg6: memref<32x32xf32, #tpu.memory_space<vmem>>, %arg7: memref<1x32xf32, #tpu.memory_space<vmem>>, %arg8: memref<32x32xf32, #tpu.memory_space<vmem>>, %arg9: memref<1x32xf32, #tpu.memory_space<vmem>>, %arg10: memref<32x32xf32, #tpu.memory_space<vmem>>, %arg11: memref<1x32xf32, #tpu.memory_space<vmem>>, %arg12: memref<8x2x32xf32, #tpu.memory_space<vmem>>, %arg13: memref<2x8x8xf32, #tpu.memory_space<vmem>>) attributes {dimension_semantics = [#tpu.dimension_semantics<arbitrary>], iteration_bounds = array<i64: 1>, scalar_prefetch = 0 : i64, scratch_operands = 0 : i64, tpu.core_type = #tpu.core_type<tc>, window_params = [{pipeline_mode = #tpu.pipeline_mode<synchronous>, transform_indices = @transform_0, window_bounds = array<i64: 8, 2, 32>}, {pipeline_mode = #tpu.pipeline_mode<synchronous>, transform_indices = @transform_1, window_bounds = array<i64: 8, 2, 32>}, {pipeline_mode = #tpu.pipeline_mode<synchronous>, transform_indices = @transform_2, window_bounds = array<i64: 8, 2, 32>}, {pipeline_mode = #tpu.pipeline_mode<synchronous>, transform_indices = @transform_3, window_bounds = array<i64: 32, 32>}, {pipeline_mode = #tpu.pipeline_mode<synchronous>, transform_indices = @transform_4, window_bounds = array<i64: 1, 32>}, {pipeline_mode = #tpu.pipeline_mode<synchronous>, transform_indices = @transform_5, window_bounds = array<i64: 32, 32>}, {pipeline_mode = #tpu.pipeline_mode<synchronous>, transform_indices = @transform_6, window_bounds = array<i64: 1, 32>}, {pipeline_mode = #tpu.pipeline_mode<synchronous>, transform_indices = @transform_7, window_bounds = array<i64: 32, 32>}, {pipeline_mode = #tpu.pipeline_mode<synchronous>, transform_indices = @transform_8, window_bounds = array<i64: 1, 32>}, {pipeline_mode = #tpu.pipeline_mode<synchronous>, transform_indices = @transform_9, window_bounds = array<i64: 32, 32>}, {pipeline_mode = #tpu.pipeline_mode<synchronous>, transform_indices = @transform_10, window_bounds = array<i64: 1, 32>}, {pipeline_mode = #tpu.pipeline_mode<synchronous>, transform_indices = @transform_11, window_bounds = array<i64: 8, 2, 32>}, {pipeline_mode = #tpu.pipeline_mode<synchronous>, transform_indices = @transform_12, window_bounds = array<i64: 2, 8, 8>}]} {
    %c0 = arith.constant 0 : index
    %c0_0 = arith.constant 0 : index
    %0 = vector.load %arg4[%c0, %c0_0] : memref<32x32xf32, #tpu.memory_space<vmem>>, vector<32x32xf32>
    %c0_1 = arith.constant 0 : index
    %c0_2 = arith.constant 0 : index
    %1 = vector.load %arg5[%c0_1, %c0_2] : memref<1x32xf32, #tpu.memory_space<vmem>>, vector<1x32xf32>
    %c0_3 = arith.constant 0 : index
    %c0_4 = arith.constant 0 : index
    %2 = vector.load %arg6[%c0_3, %c0_4] : memref<32x32xf32, #tpu.memory_space<vmem>>, vector<32x32xf32>
    %c0_5 = arith.constant 0 : index
    %c0_6 = arith.constant 0 : index
    %3 = vector.load %arg7[%c0_5, %c0_6] : memref<1x32xf32, #tpu.memory_space<vmem>>, vector<1x32xf32>
    %c0_7 = arith.constant 0 : index
    %c0_8 = arith.constant 0 : index
    %4 = vector.load %arg8[%c0_7, %c0_8] : memref<32x32xf32, #tpu.memory_space<vmem>>, vector<32x32xf32>
    %c0_9 = arith.constant 0 : index
    %c0_10 = arith.constant 0 : index
    %5 = vector.load %arg9[%c0_9, %c0_10] : memref<1x32xf32, #tpu.memory_space<vmem>>, vector<1x32xf32>
    %c0_11 = arith.constant 0 : index
    %c0_12 = arith.constant 0 : index
    %6 = vector.load %arg10[%c0_11, %c0_12] : memref<32x32xf32, #tpu.memory_space<vmem>>, vector<32x32xf32>
    %c0_13 = arith.constant 0 : index
    %c0_14 = arith.constant 0 : index
    %7 = vector.load %arg11[%c0_13, %c0_14] : memref<1x32xf32, #tpu.memory_space<vmem>>, vector<1x32xf32>
    %8 = tpu.iota {dimensions = array<i32: 1>} : vector<1x32xi32>
    %c0_i32 = arith.constant 0 : i32
    %9 = vector.broadcast %c0_i32 : i32 to vector<1x32xi32>
    %10 = arith.cmpi sge, %8, %9 : vector<1x32xi32>
    %c8_i32 = arith.constant 8 : i32
    %11 = vector.broadcast %c8_i32 : i32 to vector<1x32xi32>
    %12 = arith.cmpi slt, %8, %11 : vector<1x32xi32>
    %13 = arith.andi %10, %12 : vector<1x32xi1>
    %14 = arith.extui %13 : vector<1x32xi1> to vector<1x32xi32>
    %15 = arith.sitofp %14 : vector<1x32xi32> to vector<1x32xf32>
    %c8_i32_15 = arith.constant 8 : i32
    %16 = vector.broadcast %c8_i32_15 : i32 to vector<1x32xi32>
    %17 = arith.cmpi sge, %8, %16 : vector<1x32xi32>
    %c16_i32 = arith.constant 16 : i32
    %18 = vector.broadcast %c16_i32 : i32 to vector<1x32xi32>
    %19 = arith.cmpi slt, %8, %18 : vector<1x32xi32>
    %20 = arith.andi %17, %19 : vector<1x32xi1>
    %21 = arith.extui %20 : vector<1x32xi1> to vector<1x32xi32>
    %22 = arith.sitofp %21 : vector<1x32xi32> to vector<1x32xf32>
    %c16_i32_16 = arith.constant 16 : i32
    %23 = vector.broadcast %c16_i32_16 : i32 to vector<1x32xi32>
    %24 = arith.cmpi sge, %8, %23 : vector<1x32xi32>
    %c24_i32 = arith.constant 24 : i32
    %25 = vector.broadcast %c24_i32 : i32 to vector<1x32xi32>
    %26 = arith.cmpi slt, %8, %25 : vector<1x32xi32>
    %27 = arith.andi %24, %26 : vector<1x32xi1>
    %28 = arith.extui %27 : vector<1x32xi1> to vector<1x32xi32>
    %29 = arith.sitofp %28 : vector<1x32xi32> to vector<1x32xf32>
    %c24_i32_17 = arith.constant 24 : i32
    %30 = vector.broadcast %c24_i32_17 : i32 to vector<1x32xi32>
    %31 = arith.cmpi sge, %8, %30 : vector<1x32xi32>
    %c32_i32 = arith.constant 32 : i32
    %32 = vector.broadcast %c32_i32 : i32 to vector<1x32xi32>
    %33 = arith.cmpi slt, %8, %32 : vector<1x32xi32>
    %34 = arith.andi %31, %33 : vector<1x32xi1>
    %35 = arith.extui %34 : vector<1x32xi1> to vector<1x32xi32>
    %36 = arith.sitofp %35 : vector<1x32xi32> to vector<1x32xf32>
    %c0_18 = arith.constant 0 : index
    %c0_19 = arith.constant 0 : index
    %c0_20 = arith.constant 0 : index
    %37 = vector.load %arg1[%c0_18, %c0_19, %c0_20] : memref<8x2x32xf32, #tpu.memory_space<vmem>>, vector<8x1x32xf32>
    %38 = vector.shape_cast %37 : vector<8x1x32xf32> to vector<8x32xf32>
    %c0_21 = arith.constant 0 : index
    %c0_22 = arith.constant 0 : index
    %c0_23 = arith.constant 0 : index
    %39 = vector.load %arg2[%c0_21, %c0_22, %c0_23] : memref<8x2x32xf32, #tpu.memory_space<vmem>>, vector<8x1x32xf32>
    %40 = vector.shape_cast %39 : vector<8x1x32xf32> to vector<8x32xf32>
    %c0_24 = arith.constant 0 : index
    %c0_25 = arith.constant 0 : index
    %c0_26 = arith.constant 0 : index
    %41 = vector.load %arg3[%c0_24, %c0_25, %c0_26] : memref<8x2x32xf32, #tpu.memory_space<vmem>>, vector<8x1x32xf32>
    %42 = vector.shape_cast %41 : vector<8x1x32xf32> to vector<8x32xf32>
    %cst = arith.constant dense<0.000000e+00> : vector<8x32xf32>
    %43 = tpu.matmul %38, %0, %cst {dimension_numbers = #tpu.dot_dimension_numbers<[1], [1], [0], [0], [0, 0, 1, 0], [], []>} : vector<8x32xf32>, vector<32x32xf32>, vector<8x32xf32> -> vector<8x32xf32>
    %44 = vector.broadcast %1 : vector<1x32xf32> to vector<8x32xf32>
    %45 = arith.addf %43, %44 : vector<8x32xf32>
    %cst_27 = arith.constant dense<0.000000e+00> : vector<8x32xf32>
    %46 = tpu.matmul %40, %2, %cst_27 {dimension_numbers = #tpu.dot_dimension_numbers<[1], [1], [0], [0], [0, 0, 1, 0], [], []>} : vector<8x32xf32>, vector<32x32xf32>, vector<8x32xf32> -> vector<8x32xf32>
    %47 = vector.broadcast %3 : vector<1x32xf32> to vector<8x32xf32>
    %48 = arith.addf %46, %47 : vector<8x32xf32>
    %cst_28 = arith.constant dense<0.000000e+00> : vector<8x32xf32>
    %49 = tpu.matmul %42, %4, %cst_28 {dimension_numbers = #tpu.dot_dimension_numbers<[1], [1], [0], [0], [0, 0, 1, 0], [], []>} : vector<8x32xf32>, vector<32x32xf32>, vector<8x32xf32> -> vector<8x32xf32>
    %50 = vector.broadcast %5 : vector<1x32xf32> to vector<8x32xf32>
    %51 = arith.addf %49, %50 : vector<8x32xf32>
    %cst_29 = arith.constant 0.000000e+00 : f32
    %52 = vector.broadcast %cst_29 : f32 to vector<8x32xf32>
    %cst_30 = arith.constant 0.000000e+00 : f32
    %53 = vector.broadcast %cst_30 : f32 to vector<8x8xf32>
    %54 = vector.broadcast %15 : vector<1x32xf32> to vector<8x32xf32>
    %55 = arith.mulf %45, %54 : vector<8x32xf32>
    %cst_31 = arith.constant dense<0.000000e+00> : vector<8x8xf32>
    %56 = tpu.matmul %55, %48, %cst_31 {dimension_numbers = #tpu.dot_dimension_numbers<[1], [1], [0], [0], [0, 0, 1, 0], [], []>} : vector<8x32xf32>, vector<8x32xf32>, vector<8x8xf32> -> vector<8x8xf32>
    %cst_32 = arith.constant dense<0xFF800000> : vector<8xf32>
    %57 = vector.multi_reduction <maximumf>, %56, %cst_32 [1] : vector<8x8xf32> to vector<8xf32>
    %58 = vector.shape_cast %57 : vector<8xf32> to vector<8x1xf32>
    %59 = vector.broadcast %58 : vector<8x1xf32> to vector<8x8xf32>
    %60 = arith.subf %56, %59 : vector<8x8xf32>
    %61 = math.exp %60 : vector<8x8xf32>
    %cst_33 = arith.constant dense<0.000000e+00> : vector<8xf32>
    %62 = vector.multi_reduction <add>, %61, %cst_33 [1] : vector<8x8xf32> to vector<8xf32>
    %63 = vector.shape_cast %62 : vector<8xf32> to vector<8x1xf32>
    %64 = vector.broadcast %63 : vector<8x1xf32> to vector<8x8xf32>
    %65 = arith.divf %61, %64 : vector<8x8xf32>
    %66 = arith.addf %53, %65 : vector<8x8xf32>
    %cst_34 = arith.constant dense<0.000000e+00> : vector<8x32xf32>
    %67 = tpu.matmul %65, %51, %cst_34 {dimension_numbers = #tpu.dot_dimension_numbers<[1], [0], [0], [1], [0, 0, 1, 1], [], []>} : vector<8x8xf32>, vector<8x32xf32>, vector<8x32xf32> -> vector<8x32xf32>
    %68 = vector.broadcast %15 : vector<1x32xf32> to vector<8x32xf32>
    %69 = arith.mulf %67, %68 : vector<8x32xf32>
    %70 = arith.addf %52, %69 : vector<8x32xf32>
    %71 = vector.broadcast %22 : vector<1x32xf32> to vector<8x32xf32>
    %72 = arith.mulf %45, %71 : vector<8x32xf32>
    %cst_35 = arith.constant dense<0.000000e+00> : vector<8x8xf32>
    %73 = tpu.matmul %72, %48, %cst_35 {dimension_numbers = #tpu.dot_dimension_numbers<[1], [1], [0], [0], [0, 0, 1, 0], [], []>} : vector<8x32xf32>, vector<8x32xf32>, vector<8x8xf32> -> vector<8x8xf32>
    %cst_36 = arith.constant dense<0xFF800000> : vector<8xf32>
    %74 = vector.multi_reduction <maximumf>, %73, %cst_36 [1] : vector<8x8xf32> to vector<8xf32>
    %75 = vector.shape_cast %74 : vector<8xf32> to vector<8x1xf32>
    %76 = vector.broadcast %75 : vector<8x1xf32> to vector<8x8xf32>
    %77 = arith.subf %73, %76 : vector<8x8xf32>
    %78 = math.exp %77 : vector<8x8xf32>
    %cst_37 = arith.constant dense<0.000000e+00> : vector<8xf32>
    %79 = vector.multi_reduction <add>, %78, %cst_37 [1] : vector<8x8xf32> to vector<8xf32>
    %80 = vector.shape_cast %79 : vector<8xf32> to vector<8x1xf32>
    %81 = vector.broadcast %80 : vector<8x1xf32> to vector<8x8xf32>
    %82 = arith.divf %78, %81 : vector<8x8xf32>
    %83 = arith.addf %66, %82 : vector<8x8xf32>
    %cst_38 = arith.constant dense<0.000000e+00> : vector<8x32xf32>
    %84 = tpu.matmul %82, %51, %cst_38 {dimension_numbers = #tpu.dot_dimension_numbers<[1], [0], [0], [1], [0, 0, 1, 1], [], []>} : vector<8x8xf32>, vector<8x32xf32>, vector<8x32xf32> -> vector<8x32xf32>
    %85 = vector.broadcast %22 : vector<1x32xf32> to vector<8x32xf32>
    %86 = arith.mulf %84, %85 : vector<8x32xf32>
    %87 = arith.addf %70, %86 : vector<8x32xf32>
    %88 = vector.broadcast %29 : vector<1x32xf32> to vector<8x32xf32>
    %89 = arith.mulf %45, %88 : vector<8x32xf32>
    %cst_39 = arith.constant dense<0.000000e+00> : vector<8x8xf32>
    %90 = tpu.matmul %89, %48, %cst_39 {dimension_numbers = #tpu.dot_dimension_numbers<[1], [1], [0], [0], [0, 0, 1, 0], [], []>} : vector<8x32xf32>, vector<8x32xf32>, vector<8x8xf32> -> vector<8x8xf32>
    %cst_40 = arith.constant dense<0xFF800000> : vector<8xf32>
    %91 = vector.multi_reduction <maximumf>, %90, %cst_40 [1] : vector<8x8xf32> to vector<8xf32>
    %92 = vector.shape_cast %91 : vector<8xf32> to vector<8x1xf32>
    %93 = vector.broadcast %92 : vector<8x1xf32> to vector<8x8xf32>
    %94 = arith.subf %90, %93 : vector<8x8xf32>
    %95 = math.exp %94 : vector<8x8xf32>
    %cst_41 = arith.constant dense<0.000000e+00> : vector<8xf32>
    %96 = vector.multi_reduction <add>, %95, %cst_41 [1] : vector<8x8xf32> to vector<8xf32>
    %97 = vector.shape_cast %96 : vector<8xf32> to vector<8x1xf32>
    %98 = vector.broadcast %97 : vector<8x1xf32> to vector<8x8xf32>
    %99 = arith.divf %95, %98 : vector<8x8xf32>
    %100 = arith.addf %83, %99 : vector<8x8xf32>
    %cst_42 = arith.constant dense<0.000000e+00> : vector<8x32xf32>
    %101 = tpu.matmul %99, %51, %cst_42 {dimension_numbers = #tpu.dot_dimension_numbers<[1], [0], [0], [1], [0, 0, 1, 1], [], []>} : vector<8x8xf32>, vector<8x32xf32>, vector<8x32xf32> -> vector<8x32xf32>
    %102 = vector.broadcast %29 : vector<1x32xf32> to vector<8x32xf32>
    %103 = arith.mulf %101, %102 : vector<8x32xf32>
    %104 = arith.addf %87, %103 : vector<8x32xf32>
    %105 = vector.broadcast %36 : vector<1x32xf32> to vector<8x32xf32>
    %106 = arith.mulf %45, %105 : vector<8x32xf32>
    %cst_43 = arith.constant dense<0.000000e+00> : vector<8x8xf32>
    %107 = tpu.matmul %106, %48, %cst_43 {dimension_numbers = #tpu.dot_dimension_numbers<[1], [1], [0], [0], [0, 0, 1, 0], [], []>} : vector<8x32xf32>, vector<8x32xf32>, vector<8x8xf32> -> vector<8x8xf32>
    %cst_44 = arith.constant dense<0xFF800000> : vector<8xf32>
    %108 = vector.multi_reduction <maximumf>, %107, %cst_44 [1] : vector<8x8xf32> to vector<8xf32>
    %109 = vector.shape_cast %108 : vector<8xf32> to vector<8x1xf32>
    %110 = vector.broadcast %109 : vector<8x1xf32> to vector<8x8xf32>
    %111 = arith.subf %107, %110 : vector<8x8xf32>
    %112 = math.exp %111 : vector<8x8xf32>
    %cst_45 = arith.constant dense<0.000000e+00> : vector<8xf32>
    %113 = vector.multi_reduction <add>, %112, %cst_45 [1] : vector<8x8xf32> to vector<8xf32>
    %114 = vector.shape_cast %113 : vector<8xf32> to vector<8x1xf32>
    %115 = vector.broadcast %114 : vector<8x1xf32> to vector<8x8xf32>
    %116 = arith.divf %112, %115 : vector<8x8xf32>
    %117 = arith.addf %100, %116 : vector<8x8xf32>
    %cst_46 = arith.constant dense<0.000000e+00> : vector<8x32xf32>
    %118 = tpu.matmul %116, %51, %cst_46 {dimension_numbers = #tpu.dot_dimension_numbers<[1], [0], [0], [1], [0, 0, 1, 1], [], []>} : vector<8x8xf32>, vector<8x32xf32>, vector<8x32xf32> -> vector<8x32xf32>
    %119 = vector.broadcast %36 : vector<1x32xf32> to vector<8x32xf32>
    %120 = arith.mulf %118, %119 : vector<8x32xf32>
    %121 = arith.addf %104, %120 : vector<8x32xf32>
    %cst_47 = arith.constant dense<0.000000e+00> : vector<8x32xf32>
    %122 = tpu.matmul %121, %6, %cst_47 {dimension_numbers = #tpu.dot_dimension_numbers<[1], [1], [0], [0], [0, 0, 1, 0], [], []>} : vector<8x32xf32>, vector<32x32xf32>, vector<8x32xf32> -> vector<8x32xf32>
    %123 = vector.broadcast %7 : vector<1x32xf32> to vector<8x32xf32>
    %124 = arith.addf %122, %123 : vector<8x32xf32>
    %c0_48 = arith.constant 0 : index
    %c0_49 = arith.constant 0 : index
    %c0_50 = arith.constant 0 : index
    %125 = vector.load %arg12[%c0_48, %c0_49, %c0_50] : memref<8x2x32xf32, #tpu.memory_space<vmem>>, vector<8x1x32xf32>
    %126 = vector.shape_cast %125 : vector<8x1x32xf32> to vector<8x32xf32>
    %127 = vector.shape_cast %124 : vector<8x32xf32> to vector<8x1x32xf32>
    tpu.vector_store %arg12[%c0_48, %c0_49, %c0_50], %127 {strides = array<i32>} : memref<8x2x32xf32, #tpu.memory_space<vmem>>, vector<8x1x32xf32>,
    %cst_51 = arith.constant 2.500000e-01 : f32
    %128 = vector.broadcast %cst_51 : f32 to vector<8x8xf32>
    %129 = arith.mulf %117, %128 : vector<8x8xf32>
    %c0_52 = arith.constant 0 : index
    %c0_53 = arith.constant 0 : index
    %c0_54 = arith.constant 0 : index
    %130 = vector.load %arg13[%c0_52, %c0_53, %c0_54] : memref<2x8x8xf32, #tpu.memory_space<vmem>>, vector<1x8x8xf32>
    %131 = vector.shape_cast %130 : vector<1x8x8xf32> to vector<8x8xf32>
    %132 = vector.shape_cast %129 : vector<8x8xf32> to vector<1x8x8xf32>
    tpu.vector_store %arg13[%c0_52, %c0_53, %c0_54], %132 {strides = array<i32>} : memref<2x8x8xf32, #tpu.memory_space<vmem>>, vector<1x8x8xf32>,
    %c0_55 = arith.constant 0 : index
    %c1 = arith.constant 1 : index
    %c0_56 = arith.constant 0 : index
    %133 = vector.load %arg1[%c0_55, %c1, %c0_56] : memref<8x2x32xf32, #tpu.memory_space<vmem>>, vector<8x1x32xf32>
    %134 = vector.shape_cast %133 : vector<8x1x32xf32> to vector<8x32xf32>
    %c0_57 = arith.constant 0 : index
    %c1_58 = arith.constant 1 : index
    %c0_59 = arith.constant 0 : index
    %135 = vector.load %arg2[%c0_57, %c1_58, %c0_59] : memref<8x2x32xf32, #tpu.memory_space<vmem>>, vector<8x1x32xf32>
    %136 = vector.shape_cast %135 : vector<8x1x32xf32> to vector<8x32xf32>
    %c0_60 = arith.constant 0 : index
    %c1_61 = arith.constant 1 : index
    %c0_62 = arith.constant 0 : index
    %137 = vector.load %arg3[%c0_60, %c1_61, %c0_62] : memref<8x2x32xf32, #tpu.memory_space<vmem>>, vector<8x1x32xf32>
    %138 = vector.shape_cast %137 : vector<8x1x32xf32> to vector<8x32xf32>
    %cst_63 = arith.constant dense<0.000000e+00> : vector<8x32xf32>
    %139 = tpu.matmul %134, %0, %cst_63 {dimension_numbers = #tpu.dot_dimension_numbers<[1], [1], [0], [0], [0, 0, 1, 0], [], []>} : vector<8x32xf32>, vector<32x32xf32>, vector<8x32xf32> -> vector<8x32xf32>
    %140 = vector.broadcast %1 : vector<1x32xf32> to vector<8x32xf32>
    %141 = arith.addf %139, %140 : vector<8x32xf32>
    %cst_64 = arith.constant dense<0.000000e+00> : vector<8x32xf32>
    %142 = tpu.matmul %136, %2, %cst_64 {dimension_numbers = #tpu.dot_dimension_numbers<[1], [1], [0], [0], [0, 0, 1, 0], [], []>} : vector<8x32xf32>, vector<32x32xf32>, vector<8x32xf32> -> vector<8x32xf32>
    %143 = vector.broadcast %3 : vector<1x32xf32> to vector<8x32xf32>
    %144 = arith.addf %142, %143 : vector<8x32xf32>
    %cst_65 = arith.constant dense<0.000000e+00> : vector<8x32xf32>
    %145 = tpu.matmul %138, %4, %cst_65 {dimension_numbers = #tpu.dot_dimension_numbers<[1], [1], [0], [0], [0, 0, 1, 0], [], []>} : vector<8x32xf32>, vector<32x32xf32>, vector<8x32xf32> -> vector<8x32xf32>
    %146 = vector.broadcast %5 : vector<1x32xf32> to vector<8x32xf32>
    %147 = arith.addf %145, %146 : vector<8x32xf32>
    %cst_66 = arith.constant 0.000000e+00 : f32
    %148 = vector.broadcast %cst_66 : f32 to vector<8x32xf32>
    %cst_67 = arith.constant 0.000000e+00 : f32
    %149 = vector.broadcast %cst_67 : f32 to vector<8x8xf32>
    %150 = vector.broadcast %15 : vector<1x32xf32> to vector<8x32xf32>
    %151 = arith.mulf %141, %150 : vector<8x32xf32>
    %cst_68 = arith.constant dense<0.000000e+00> : vector<8x8xf32>
    %152 = tpu.matmul %151, %144, %cst_68 {dimension_numbers = #tpu.dot_dimension_numbers<[1], [1], [0], [0], [0, 0, 1, 0], [], []>} : vector<8x32xf32>, vector<8x32xf32>, vector<8x8xf32> -> vector<8x8xf32>
    %cst_69 = arith.constant dense<0xFF800000> : vector<8xf32>
    %153 = vector.multi_reduction <maximumf>, %152, %cst_69 [1] : vector<8x8xf32> to vector<8xf32>
    %154 = vector.shape_cast %153 : vector<8xf32> to vector<8x1xf32>
    %155 = vector.broadcast %154 : vector<8x1xf32> to vector<8x8xf32>
    %156 = arith.subf %152, %155 : vector<8x8xf32>
    %157 = math.exp %156 : vector<8x8xf32>
    %cst_70 = arith.constant dense<0.000000e+00> : vector<8xf32>
    %158 = vector.multi_reduction <add>, %157, %cst_70 [1] : vector<8x8xf32> to vector<8xf32>
    %159 = vector.shape_cast %158 : vector<8xf32> to vector<8x1xf32>
    %160 = vector.broadcast %159 : vector<8x1xf32> to vector<8x8xf32>
    %161 = arith.divf %157, %160 : vector<8x8xf32>
    %162 = arith.addf %149, %161 : vector<8x8xf32>
    %cst_71 = arith.constant dense<0.000000e+00> : vector<8x32xf32>
    %163 = tpu.matmul %161, %147, %cst_71 {dimension_numbers = #tpu.dot_dimension_numbers<[1], [0], [0], [1], [0, 0, 1, 1], [], []>} : vector<8x8xf32>, vector<8x32xf32>, vector<8x32xf32> -> vector<8x32xf32>
    %164 = vector.broadcast %15 : vector<1x32xf32> to vector<8x32xf32>
    %165 = arith.mulf %163, %164 : vector<8x32xf32>
    %166 = arith.addf %148, %165 : vector<8x32xf32>
    %167 = vector.broadcast %22 : vector<1x32xf32> to vector<8x32xf32>
    %168 = arith.mulf %141, %167 : vector<8x32xf32>
    %cst_72 = arith.constant dense<0.000000e+00> : vector<8x8xf32>
    %169 = tpu.matmul %168, %144, %cst_72 {dimension_numbers = #tpu.dot_dimension_numbers<[1], [1], [0], [0], [0, 0, 1, 0], [], []>} : vector<8x32xf32>, vector<8x32xf32>, vector<8x8xf32> -> vector<8x8xf32>
    %cst_73 = arith.constant dense<0xFF800000> : vector<8xf32>
    %170 = vector.multi_reduction <maximumf>, %169, %cst_73 [1] : vector<8x8xf32> to vector<8xf32>
    %171 = vector.shape_cast %170 : vector<8xf32> to vector<8x1xf32>
    %172 = vector.broadcast %171 : vector<8x1xf32> to vector<8x8xf32>
    %173 = arith.subf %169, %172 : vector<8x8xf32>
    %174 = math.exp %173 : vector<8x8xf32>
    %cst_74 = arith.constant dense<0.000000e+00> : vector<8xf32>
    %175 = vector.multi_reduction <add>, %174, %cst_74 [1] : vector<8x8xf32> to vector<8xf32>
    %176 = vector.shape_cast %175 : vector<8xf32> to vector<8x1xf32>
    %177 = vector.broadcast %176 : vector<8x1xf32> to vector<8x8xf32>
    %178 = arith.divf %174, %177 : vector<8x8xf32>
    %179 = arith.addf %162, %178 : vector<8x8xf32>
    %cst_75 = arith.constant dense<0.000000e+00> : vector<8x32xf32>
    %180 = tpu.matmul %178, %147, %cst_75 {dimension_numbers = #tpu.dot_dimension_numbers<[1], [0], [0], [1], [0, 0, 1, 1], [], []>} : vector<8x8xf32>, vector<8x32xf32>, vector<8x32xf32> -> vector<8x32xf32>
    %181 = vector.broadcast %22 : vector<1x32xf32> to vector<8x32xf32>
    %182 = arith.mulf %180, %181 : vector<8x32xf32>
    %183 = arith.addf %166, %182 : vector<8x32xf32>
    %184 = vector.broadcast %29 : vector<1x32xf32> to vector<8x32xf32>
    %185 = arith.mulf %141, %184 : vector<8x32xf32>
    %cst_76 = arith.constant dense<0.000000e+00> : vector<8x8xf32>
    %186 = tpu.matmul %185, %144, %cst_76 {dimension_numbers = #tpu.dot_dimension_numbers<[1], [1], [0], [0], [0, 0, 1, 0], [], []>} : vector<8x32xf32>, vector<8x32xf32>, vector<8x8xf32> -> vector<8x8xf32>
    %cst_77 = arith.constant dense<0xFF800000> : vector<8xf32>
    %187 = vector.multi_reduction <maximumf>, %186, %cst_77 [1] : vector<8x8xf32> to vector<8xf32>
    %188 = vector.shape_cast %187 : vector<8xf32> to vector<8x1xf32>
    %189 = vector.broadcast %188 : vector<8x1xf32> to vector<8x8xf32>
    %190 = arith.subf %186, %189 : vector<8x8xf32>
    %191 = math.exp %190 : vector<8x8xf32>
    %cst_78 = arith.constant dense<0.000000e+00> : vector<8xf32>
    %192 = vector.multi_reduction <add>, %191, %cst_78 [1] : vector<8x8xf32> to vector<8xf32>
    %193 = vector.shape_cast %192 : vector<8xf32> to vector<8x1xf32>
    %194 = vector.broadcast %193 : vector<8x1xf32> to vector<8x8xf32>
    %195 = arith.divf %191, %194 : vector<8x8xf32>
    %196 = arith.addf %179, %195 : vector<8x8xf32>
    %cst_79 = arith.constant dense<0.000000e+00> : vector<8x32xf32>
    %197 = tpu.matmul %195, %147, %cst_79 {dimension_numbers = #tpu.dot_dimension_numbers<[1], [0], [0], [1], [0, 0, 1, 1], [], []>} : vector<8x8xf32>, vector<8x32xf32>, vector<8x32xf32> -> vector<8x32xf32>
    %198 = vector.broadcast %29 : vector<1x32xf32> to vector<8x32xf32>
    %199 = arith.mulf %197, %198 : vector<8x32xf32>
    %200 = arith.addf %183, %199 : vector<8x32xf32>
    %201 = vector.broadcast %36 : vector<1x32xf32> to vector<8x32xf32>
    %202 = arith.mulf %141, %201 : vector<8x32xf32>
    %cst_80 = arith.constant dense<0.000000e+00> : vector<8x8xf32>
    %203 = tpu.matmul %202, %144, %cst_80 {dimension_numbers = #tpu.dot_dimension_numbers<[1], [1], [0], [0], [0, 0, 1, 0], [], []>} : vector<8x32xf32>, vector<8x32xf32>, vector<8x8xf32> -> vector<8x8xf32>
    %cst_81 = arith.constant dense<0xFF800000> : vector<8xf32>
    %204 = vector.multi_reduction <maximumf>, %203, %cst_81 [1] : vector<8x8xf32> to vector<8xf32>
    %205 = vector.shape_cast %204 : vector<8xf32> to vector<8x1xf32>
    %206 = vector.broadcast %205 : vector<8x1xf32> to vector<8x8xf32>
    %207 = arith.subf %203, %206 : vector<8x8xf32>
    %208 = math.exp %207 : vector<8x8xf32>
    %cst_82 = arith.constant dense<0.000000e+00> : vector<8xf32>
    %209 = vector.multi_reduction <add>, %208, %cst_82 [1] : vector<8x8xf32> to vector<8xf32>
    %210 = vector.shape_cast %209 : vector<8xf32> to vector<8x1xf32>
    %211 = vector.broadcast %210 : vector<8x1xf32> to vector<8x8xf32>
    %212 = arith.divf %208, %211 : vector<8x8xf32>
    %213 = arith.addf %196, %212 : vector<8x8xf32>
    %cst_83 = arith.constant dense<0.000000e+00> : vector<8x32xf32>
    %214 = tpu.matmul %212, %147, %cst_83 {dimension_numbers = #tpu.dot_dimension_numbers<[1], [0], [0], [1], [0, 0, 1, 1], [], []>} : vector<8x8xf32>, vector<8x32xf32>, vector<8x32xf32> -> vector<8x32xf32>
    %215 = vector.broadcast %36 : vector<1x32xf32> to vector<8x32xf32>
    %216 = arith.mulf %214, %215 : vector<8x32xf32>
    %217 = arith.addf %200, %216 : vector<8x32xf32>
    %cst_84 = arith.constant dense<0.000000e+00> : vector<8x32xf32>
    %218 = tpu.matmul %217, %6, %cst_84 {dimension_numbers = #tpu.dot_dimension_numbers<[1], [1], [0], [0], [0, 0, 1, 0], [], []>} : vector<8x32xf32>, vector<32x32xf32>, vector<8x32xf32> -> vector<8x32xf32>
    %219 = vector.broadcast %7 : vector<1x32xf32> to vector<8x32xf32>
    %220 = arith.addf %218, %219 : vector<8x32xf32>
    %c0_85 = arith.constant 0 : index
    %c1_86 = arith.constant 1 : index
    %c0_87 = arith.constant 0 : index
    %221 = vector.load %arg12[%c0_85, %c1_86, %c0_87] : memref<8x2x32xf32, #tpu.memory_space<vmem>>, vector<8x1x32xf32>
    %222 = vector.shape_cast %221 : vector<8x1x32xf32> to vector<8x32xf32>
    %223 = vector.shape_cast %220 : vector<8x32xf32> to vector<8x1x32xf32>
    tpu.vector_store %arg12[%c0_85, %c1_86, %c0_87], %223 {strides = array<i32>} : memref<8x2x32xf32, #tpu.memory_space<vmem>>, vector<8x1x32xf32>,
    %cst_88 = arith.constant 2.500000e-01 : f32
    %224 = vector.broadcast %cst_88 : f32 to vector<8x8xf32>
    %225 = arith.mulf %213, %224 : vector<8x8xf32>
    %c1_89 = arith.constant 1 : index
    %c0_90 = arith.constant 0 : index
    %c0_91 = arith.constant 0 : index
    %226 = vector.load %arg13[%c1_89, %c0_90, %c0_91] : memref<2x8x8xf32, #tpu.memory_space<vmem>>, vector<1x8x8xf32>
    %227 = vector.shape_cast %226 : vector<1x8x8xf32> to vector<8x8xf32>
    %228 = vector.shape_cast %225 : vector<8x8xf32> to vector<1x8x8xf32>
    tpu.vector_store %arg13[%c1_89, %c0_90, %c0_91], %228 {strides = array<i32>} : memref<2x8x8xf32, #tpu.memory_space<vmem>>, vector<1x8x8xf32>,
    return
  }
  func.func @transform_0(%arg0: i32) -> (i32, i32, i32) {
    %c0_i32 = arith.constant 0 : i32
    %c0_i32_0 = arith.constant 0 : i32
    %c0_i32_1 = arith.constant 0 : i32
    %c0_i32_2 = arith.constant 0 : i32
    return %c0_i32, %c0_i32_0, %c0_i32_1 : i32, i32, i32
  }
  func.func @transform_1(%arg0: i32) -> (i32, i32, i32) {
    %c0_i32 = arith.constant 0 : i32
    %c0_i32_0 = arith.constant 0 : i32
    %c0_i32_1 = arith.constant 0 : i32
    %c0_i32_2 = arith.constant 0 : i32
    return %c0_i32, %c0_i32_0, %c0_i32_1 : i32, i32, i32
  }
  func.func @transform_2(%arg0: i32) -> (i32, i32, i32) {
    %c0_i32 = arith.constant 0 : i32
    %c0_i32_0 = arith.constant 0 : i32
    %c0_i32_1 = arith.constant 0 : i32
    %c0_i32_2 = arith.constant 0 : i32
    return %c0_i32, %c0_i32_0, %c0_i32_1 : i32, i32, i32
  }
  func.func @transform_3(%arg0: i32) -> (i32, i32) {
    %c0_i32 = arith.constant 0 : i32
    %c0_i32_0 = arith.constant 0 : i32
    %c0_i32_1 = arith.constant 0 : i32
    return %c0_i32, %c0_i32_0 : i32, i32
  }
  func.func @transform_4(%arg0: i32) -> (i32, i32) {
    %c0_i32 = arith.constant 0 : i32
    %c0_i32_0 = arith.constant 0 : i32
    %c0_i32_1 = arith.constant 0 : i32
    return %c0_i32, %c0_i32_0 : i32, i32
  }
  func.func @transform_5(%arg0: i32) -> (i32, i32) {
    %c0_i32 = arith.constant 0 : i32
    %c0_i32_0 = arith.constant 0 : i32
    %c0_i32_1 = arith.constant 0 : i32
    return %c0_i32, %c0_i32_0 : i32, i32
  }
  func.func @transform_6(%arg0: i32) -> (i32, i32) {
    %c0_i32 = arith.constant 0 : i32
    %c0_i32_0 = arith.constant 0 : i32
    %c0_i32_1 = arith.constant 0 : i32
    return %c0_i32, %c0_i32_0 : i32, i32
  }
  func.func @transform_7(%arg0: i32) -> (i32, i32) {
    %c0_i32 = arith.constant 0 : i32
    %c0_i32_0 = arith.constant 0 : i32
    %c0_i32_1 = arith.constant 0 : i32
    return %c0_i32, %c0_i32_0 : i32, i32
  }
  func.func @transform_8(%arg0: i32) -> (i32, i32) {
    %c0_i32 = arith.constant 0 : i32
    %c0_i32_0 = arith.constant 0 : i32
    %c0_i32_1 = arith.constant 0 : i32
    return %c0_i32, %c0_i32_0 : i32, i32
  }
  func.func @transform_9(%arg0: i32) -> (i32, i32) {
    %c0_i32 = arith.constant 0 : i32
    %c0_i32_0 = arith.constant 0 : i32
    %c0_i32_1 = arith.constant 0 : i32
    return %c0_i32, %c0_i32_0 : i32, i32
  }
  func.func @transform_10(%arg0: i32) -> (i32, i32) {
    %c0_i32 = arith.constant 0 : i32
    %c0_i32_0 = arith.constant 0 : i32
    %c0_i32_1 = arith.constant 0 : i32
    return %c0_i32, %c0_i32_0 : i32, i32
  }
  func.func @transform_11(%arg0: i32) -> (i32, i32, i32) {
    %c0_i32 = arith.constant 0 : i32
    %c0_i32_0 = arith.constant 0 : i32
    %c0_i32_1 = arith.constant 0 : i32
    %c0_i32_2 = arith.constant 0 : i32
    return %c0_i32, %c0_i32_0, %c0_i32_1 : i32, i32, i32
  }
  func.func @transform_12(%arg0: i32) -> (i32, i32, i32) {
    %c0_i32 = arith.constant 0 : i32
    %c0_i32_0 = arith.constant 0 : i32
    %c0_i32_1 = arith.constant 0 : i32
    %c0_i32_2 = arith.constant 0 : i32
    return %c0_i32, %c0_i32_0, %c0_i32_1 : i32, i32, i32
  }
}

</mosaic_0001>

<llo_original>
// kernel: tpu_custom_call.1
$region0: #{tpu_custom_call.1}
  #allocation0 [shape = 'u32[]', space=smem, size = 0x4, offset = 0x4, fixed_abs, tag = 'smem constant byte address 0x4 - core index']
  #allocation1 [shape = 'u32[72,128]{1,0:T(1,128)}', space=vmem, size = 0x9000, scoped, tag = 'internal scratch']
  %s0 = inlined_call_operand.hbm [shape: f32[8,2,32], index: 0, kind: input, shape index: {}]
  %s1 = inlined_call_operand.hbm [shape: f32[8,2,32], index: 1, kind: input, shape index: {}]
  %s2 = inlined_call_operand.hbm [shape: f32[8,2,32], index: 2, kind: input, shape index: {}]
  %s3 = inlined_call_operand.hbm [shape: f32[32,32], index: 3, kind: input, shape index: {}]
  %s4 = inlined_call_operand.vmem [shape: f32[1,32], index: 4, kind: input, shape index: {}]
  %s5 = inlined_call_operand.hbm [shape: f32[32,32], index: 5, kind: input, shape index: {}]
  %s6 = inlined_call_operand.vmem [shape: f32[1,32], index: 6, kind: input, shape index: {}]
  %s7 = inlined_call_operand.hbm [shape: f32[32,32], index: 7, kind: input, shape index: {}]
  %s8 = inlined_call_operand.vmem [shape: f32[1,32], index: 8, kind: input, shape index: {}]
  %s9 = inlined_call_operand.hbm [shape: f32[32,32], index: 9, kind: input, shape index: {}]
  %s10 = inlined_call_operand.vmem [shape: f32[1,32], index: 10, kind: input, shape index: {}]
  %s11 = inlined_call_operand.hbm [shape: f32[8,2,32], index: 11, kind: output, shape index: {0}]
  %s12 = inlined_call_operand.hbm [shape: f32[2,8,8], index: 12, kind: output, shape index: {1}]
  %13 = xla_tuple %s11, %s12
  %s14 = sld [smem:[#allocation0]]
  $region90: #{tpu_custom_call.1} parent=0
    _
  %s16 = ssub.s32 1, %s14
  %s17 = scalar_select 0, %s16, %s14
  $region1: #{tpu_custom_call.1} parent=0
    #allocation2 [shape = 'u8[8192]{0}', space=vmem, size = 0x2000, scoped, tag = 'input window, operand 0, single buffered']
    #allocation3 [shape = 's32[1]{0}', space=sflag, size = 0x4, scoped, tag = 'scoped memory for tpu_custom_call.1']
    #allocation4 [shape = 's32[1]{0}', space=sflag, size = 0x4, scoped, tag = 'scoped memory for tpu_custom_call.1']
    #allocation5 [shape = 'u8[8192]{0}', space=vmem, size = 0x2000, scoped, tag = 'input window, operand 1, single buffered']
    #allocation6 [shape = 's32[1]{0}', space=sflag, size = 0x4, scoped, tag = 'scoped memory for tpu_custom_call.1']
    #allocation7 [shape = 'u8[8192]{0}', space=vmem, size = 0x2000, scoped, tag = 'input window, operand 2, single buffered']
    #allocation8 [shape = 'u8[16384]{0}', space=vmem, size = 0x4000, scoped, tag = 'input window, operand 3, single buffered']
    #allocation9 [shape = 's32[1]{0}', space=sflag, size = 0x4, scoped, tag = 'scoped memory for tpu_custom_call.1']
    #allocation10 [shape = 'u8[16384]{0}', space=vmem, size = 0x4000, scoped, tag = 'input window, operand 5, single buffered']
    #allocation11 [shape = 'u8[16384]{0}', space=vmem, size = 0x4000, scoped, tag = 'input window, operand 7, single buffered']
    #allocation12 [shape = 's32[1]{0}', space=sflag, size = 0x4, scoped, tag = 'scoped memory for tpu_custom_call.1']
    #allocation13 [shape = 'u8[16384]{0}', space=vmem, size = 0x4000, scoped, tag = 'input window, operand 9, single buffered']
    #allocation14 [shape = 'u8[8192]{0}', space=vmem, size = 0x2000, scoped, tag = 'output window, operand 0, single buffered']
    #allocation15 [shape = 'u8[8192]{0}', space=vmem, size = 0x2000, scoped, tag = 'output window, operand 1, single buffered']
    #allocation16 [shape = 's32[1]{0}', space=sflag, size = 0x4, scoped, tag = 'scoped memory for tpu_custom_call.1']
    %18 = vsyncpa [#allocation3], 0
    %19 = vsyncpa [#allocation6], 0
    %20 = vsyncpa [#allocation9], 0
    %21 = vsyncpa [#allocation12], 0
    %22 = vsyncpa [#allocation4], 0
    %23 = vsyncpa [#allocation16], 0
    // Predicated region
    $region2: #{tpu_custom_call.1} parent=1 // pred_check
      _
    $region3: #{tpu_custom_call.1} parent=1 // pred_check_branch
      %25 = sbr.rel (0) target = $region5
    $region4: #{tpu_custom_call.1} parent=1 // pred_region
      %27 = vsyncadd [#allocation3], 0
      %s28 = sshll.u32 %s0, 4
      %s29 = int_to_ptr.hbm [resolvable:$true] %s28
      %s30 = sshll.u32 [#allocation2], 4
      %s31 = int_to_ptr.vmem [resolvable:$true] %s30
      %36 = dma.hbm_to_vmem [thread:$0]  %s29, 256, %s31, [#allocation3], 32, 32, 2
    $region5: #{tpu_custom_call.1} parent=1 // pred_fallthru
      _
    // Predicated region
    $region6: #{tpu_custom_call.1} parent=1 // pred_check
      _
    $region7: #{tpu_custom_call.1} parent=1 // pred_check_branch
      %38 = sbr.rel (0) target = $region9
    $region8: #{tpu_custom_call.1} parent=1 // pred_region
      %40 = vsyncadd [#allocation6], 0
      %s41 = sshll.u32 %s1, 4
      %s42 = int_to_ptr.hbm [resolvable:$true] %s41
      %s43 = sshll.u32 [#allocation5], 4
      %s44 = int_to_ptr.vmem [resolvable:$true] %s43
      %49 = dma.hbm_to_vmem [thread:$0]  %s42, 256, %s44, [#allocation6], 32, 32, 2
    $region9: #{tpu_custom_call.1} parent=1 // pred_fallthru
      _
    // Predicated region
    $region10: #{tpu_custom_call.1} parent=1 // pred_check
      _
    $region11: #{tpu_custom_call.1} parent=1 // pred_check_branch
      %51 = sbr.rel (0) target = $region13
    $region12: #{tpu_custom_call.1} parent=1 // pred_region
      %53 = vsyncadd [#allocation6], 0
      %s54 = sshll.u32 %s2, 4
      %s55 = int_to_ptr.hbm [resolvable:$true] %s54
      %s56 = sshll.u32 [#allocation7], 4
      %s57 = int_to_ptr.vmem [resolvable:$true] %s56
      %62 = dma.hbm_to_vmem [thread:$0]  %s55, 256, %s57, [#allocation6], 32, 32, 2
    $region13: #{tpu_custom_call.1} parent=1 // pred_fallthru
      _
    // Predicated region
    $region14: #{tpu_custom_call.1} parent=1 // pred_check
      _
    $region15: #{tpu_custom_call.1} parent=1 // pred_check_branch
      %64 = sbr.rel (0) target = $region17
    $region16: #{tpu_custom_call.1} parent=1 // pred_region
      %66 = vsyncadd [#allocation9], 0
      %s67 = sshll.u32 %s3, 4
      %s68 = int_to_ptr.hbm [resolvable:$true] %s67
      %s69 = sshll.u32 [#allocation8], 4
      %s70 = int_to_ptr.vmem [resolvable:$true] %s69
      %75 = dma.hbm_to_vmem [thread:$0]  %s68, 512, %s70, [#allocation9], 128, 128, 8
    $region17: #{tpu_custom_call.1} parent=1 // pred_fallthru
      _
    // Predicated region
    $region18: #{tpu_custom_call.1} parent=1 // pred_check
      _
    $region19: #{tpu_custom_call.1} parent=1 // pred_check_branch
      %77 = sbr.rel (0) target = $region21
    $region20: #{tpu_custom_call.1} parent=1 // pred_region
      _
    $region21: #{tpu_custom_call.1} parent=1 // pred_fallthru
      _
    // Predicated region
    $region22: #{tpu_custom_call.1} parent=1 // pred_check
      _
    $region23: #{tpu_custom_call.1} parent=1 // pred_check_branch
      %79 = sbr.rel (0) target = $region25
    $region24: #{tpu_custom_call.1} parent=1 // pred_region
      %81 = vsyncadd [#allocation9], 0
      %s82 = sshll.u32 %s5, 4
      %s83 = int_to_ptr.hbm [resolvable:$true] %s82
      %s84 = sshll.u32 [#allocation10], 4
      %s85 = int_to_ptr.vmem [resolvable:$true] %s84
      %90 = dma.hbm_to_vmem [thread:$0]  %s83, 512, %s85, [#allocation9], 128, 128, 8
    $region25: #{tpu_custom_call.1} parent=1 // pred_fallthru
      _
    // Predicated region
    $region26: #{tpu_custom_call.1} parent=1 // pred_check
      _
    $region27: #{tpu_custom_call.1} parent=1 // pred_check_branch
      %92 = sbr.rel (0) target = $region29
    $region28: #{tpu_custom_call.1} parent=1 // pred_region
      _
    $region29: #{tpu_custom_call.1} parent=1 // pred_fallthru
      _
    // Predicated region
    $region30: #{tpu_custom_call.1} parent=1 // pred_check
      _
    $region31: #{tpu_custom_call.1} parent=1 // pred_check_branch
      %94 = sbr.rel (0) target = $region33
    $region32: #{tpu_custom_call.1} parent=1 // pred_region
      %96 = vsyncadd [#allocation12], 0
      %s97 = sshll.u32 %s7, 4
      %s98 = int_to_ptr.hbm [resolvable:$true] %s97
      %s99 = sshll.u32 [#allocation11], 4
      %s100 = int_to_ptr.vmem [resolvable:$true] %s99
      %105 = dma.hbm_to_vmem [thread:$0]  %s98, 512, %s100, [#allocation12], 128, 128, 8
    $region33: #{tpu_custom_call.1} parent=1 // pred_fallthru
      _
    // Predicated region
    $region34: #{tpu_custom_call.1} parent=1 // pred_check
      _
    $region35: #{tpu_custom_call.1} parent=1 // pred_check_branch
      %107 = sbr.rel (0) target = $region37
    $region36: #{tpu_custom_call.1} parent=1 // pred_region
      _
    $region37: #{tpu_custom_call.1} parent=1 // pred_fallthru
      _
    // Predicated region
    $region38: #{tpu_custom_call.1} parent=1 // pred_check
      _
    $region39: #{tpu_custom_call.1} parent=1 // pred_check_branch
      %109 = sbr.rel (0) target = $region41
    $region40: #{tpu_custom_call.1} parent=1 // pred_region
      %111 = vsyncadd [#allocation12], 0
      %s112 = sshll.u32 %s9, 4
      %s113 = int_to_ptr.hbm [resolvable:$true] %s112
      %s114 = sshll.u32 [#allocation13], 4
      %s115 = int_to_ptr.vmem [resolvable:$true] %s114
      %120 = dma.hbm_to_vmem [thread:$0]  %s113, 512, %s115, [#allocation12], 128, 128, 8
    $region41: #{tpu_custom_call.1} parent=1 // pred_fallthru
      _
    // Predicated region
    $region42: #{tpu_custom_call.1} parent=1 // pred_check
      _
    $region43: #{tpu_custom_call.1} parent=1 // pred_check_branch
      %122 = sbr.rel (0) target = $region45
    $region44: #{tpu_custom_call.1} parent=1 // pred_region
      _
    $region45: #{tpu_custom_call.1} parent=1 // pred_fallthru
      _
    // Predicated region
    $region46: #{tpu_custom_call.1} parent=1 // pred_check
      _
    $region47: #{tpu_custom_call.1} parent=1 // pred_check_branch
      %124 = sbr.rel (0) target = $region49
    $region48: #{tpu_custom_call.1} parent=1 // pred_region
      %126 = dma.done [#allocation3], 256
    $region49: #{tpu_custom_call.1} parent=1 // pred_fallthru
      _
    // Predicated region
    $region50: #{tpu_custom_call.1} parent=1 // pred_check
      _
    $region51: #{tpu_custom_call.1} parent=1 // pred_check_branch
      %128 = sbr.rel (0) target = $region53
    $region52: #{tpu_custom_call.1} parent=1 // pred_region
      %130 = dma.done [#allocation6], 256
    $region53: #{tpu_custom_call.1} parent=1 // pred_fallthru
      _
    // Predicated region
    $region54: #{tpu_custom_call.1} parent=1 // pred_check
      _
    $region55: #{tpu_custom_call.1} parent=1 // pred_check_branch
      %132 = sbr.rel (0) target = $region57
    $region56: #{tpu_custom_call.1} parent=1 // pred_region
      %134 = dma.done [#allocation6], 256
    $region57: #{tpu_custom_call.1} parent=1 // pred_fallthru
      _
    // Predicated region
    $region58: #{tpu_custom_call.1} parent=1 // pred_check
      _
    $region59: #{tpu_custom_call.1} parent=1 // pred_check_branch
      %136 = sbr.rel (0) target = $region61
    $region60: #{tpu_custom_call.1} parent=1 // pred_region
      %138 = dma.done [#allocation9], 512
    $region61: #{tpu_custom_call.1} parent=1 // pred_fallthru
      _
    // Predicated region
    $region62: #{tpu_custom_call.1} parent=1 // pred_check
      _
    $region63: #{tpu_custom_call.1} parent=1 // pred_check_branch
      %140 = sbr.rel (0) target = $region65
    $region64: #{tpu_custom_call.1} parent=1 // pred_region
      %142 = dma.done [#allocation9], 512
    $region65: #{tpu_custom_call.1} parent=1 // pred_fallthru
      _
    // Predicated region
    $region66: #{tpu_custom_call.1} parent=1 // pred_check
      _
    $region67: #{tpu_custom_call.1} parent=1 // pred_check_branch
      %144 = sbr.rel (0) target = $region69
    $region68: #{tpu_custom_call.1} parent=1 // pred_region
      %146 = dma.done [#allocation12], 512
    $region69: #{tpu_custom_call.1} parent=1 // pred_fallthru
      _
    // Predicated region
    $region70: #{tpu_custom_call.1} parent=1 // pred_check
      _
    $region71: #{tpu_custom_call.1} parent=1 // pred_check_branch
      %148 = sbr.rel (0) target = $region73
    $region72: #{tpu_custom_call.1} parent=1 // pred_region
      %150 = dma.done [#allocation12], 512
    $region73: #{tpu_custom_call.1} parent=1 // pred_fallthru
      _
    %v151 = vld [vmem:[#allocation8] sm:$0xff]
    %v152 = vld [vmem:[#allocation8 + $0x8] sm:$0xff]
    %v153 = vld [vmem:[#allocation8 + $0x10] sm:$0xff]
    %v154 = vld [vmem:[#allocation8 + $0x18] sm:$0xff]
    %v155 = vld [vmem:[%s4] sm:$0x1]
    %v156 = vld [vmem:[#allocation10] sm:$0xff]
    %v157 = vld [vmem:[#allocation10 + $0x8] sm:$0xff]
    %v158 = vld [vmem:[#allocation10 + $0x10] sm:$0xff]
    %v159 = vld [vmem:[#allocation10 + $0x18] sm:$0xff]
    %v160 = vld [vmem:[%s6] sm:$0x1]
    %v161 = vld [vmem:[#allocation11] sm:$0xff]
    %v162 = vld [vmem:[#allocation11 + $0x8] sm:$0xff]
    %v163 = vld [vmem:[#allocation11 + $0x10] sm:$0xff]
    %v164 = vld [vmem:[#allocation11 + $0x18] sm:$0xff]
    %v165 = vld [vmem:[%s8] sm:$0x1]
    %v166 = vld [vmem:[#allocation13] sm:$0xff]
    %v167 = vld [vmem:[#allocation13 + $0x8] sm:$0xff]
    %v168 = vld [vmem:[#allocation13 + $0x10] sm:$0xff]
    %v169 = vld [vmem:[#allocation13 + $0x18] sm:$0xff]
    %v170 = vld [vmem:[%s10] sm:$0x1]
    %v171 = vlaneseq
    %v172 = vand.u32 %v171, 127
    %vm173 = vcmp.ge.s32.totalorder %v172, 0
    %vm174 = vcmp.lt.s32.totalorder %v172, 8
    %vm175 = vmand %vm173, %vm174
    %v176 = vsel %vm175, 1, 0
    %v177 = vcvt.s32.f32 %v176
    %vm178 = vcmp.ge.s32.totalorder %v172, 8
    %vm179 = vcmp.lt.s32.totalorder %v172, 16
    %vm180 = vmand %vm178, %vm179
    %v181 = vsel %vm180, 1, 0
    %v182 = vcvt.s32.f32 %v181
    %vm183 = vcmp.ge.s32.totalorder %v172, 16
    %vm184 = vcmp.lt.s32.totalorder %v172, 24
    %vm185 = vmand %vm183, %vm184
    %v186 = vsel %vm185, 1, 0
    %v187 = vcvt.s32.f32 %v186
    %vm188 = vcmp.ge.s32.totalorder %v172, 24
    %vm189 = vcmp.lt.s32.totalorder %v172, 32
    %vm190 = vmand %vm188, %vm189
    %v191 = vsel %vm190, 1, 0
    %v192 = vcvt.s32.f32 %v191
    %v193 = vld [vmem:[#allocation2] sm:$0x1]
    %v194 = vld [vmem:[#allocation2 + $0x2] sm:$0x1]
    %v195 = vld [vmem:[#allocation2 + $0x4] sm:$0x1]
    %v196 = vld [vmem:[#allocation2 + $0x6] sm:$0x1]
    %v197 = vld [vmem:[#allocation2 + $0x8] sm:$0x1]
    %v198 = vld [vmem:[#allocation2 + $0xa] sm:$0x1]
    %v199 = vld [vmem:[#allocation2 + $0xc] sm:$0x1]
    %v200 = vld [vmem:[#allocation2 + $0xe] sm:$0x1]
    %v201 = vld [vmem:[#allocation5] sm:$0x1]
    %v202 = vld [vmem:[#allocation5 + $0x2] sm:$0x1]
    %v203 = vld [vmem:[#allocation5 + $0x4] sm:$0x1]
    %v204 = vld [vmem:[#allocation5 + $0x6] sm:$0x1]
    %v205 = vld [vmem:[#allocation5 + $0x8] sm:$0x1]
    %v206 = vld [vmem:[#allocation5 + $0xa] sm:$0x1]
    %v207 = vld [vmem:[#allocation5 + $0xc] sm:$0x1]
    %v208 = vld [vmem:[#allocation5 + $0xe] sm:$0x1]
    %v209 = vld [vmem:[#allocation7] sm:$0x1]
    %v210 = vld [vmem:[#allocation7 + $0x2] sm:$0x1]
    %v211 = vld [vmem:[#allocation7 + $0x4] sm:$0x1]
    %v212 = vld [vmem:[#allocation7 + $0x6] sm:$0x1]
    %v213 = vld [vmem:[#allocation7 + $0x8] sm:$0x1]
    %v214 = vld [vmem:[#allocation7 + $0xa] sm:$0x1]
    %v215 = vld [vmem:[#allocation7 + $0xc] sm:$0x1]
    %v216 = vld [vmem:[#allocation7 + $0xe] sm:$0x1]
    %v218 = vperm.slane %v155, 0
    %v228 = vrot.slane %v194, 7
    %vm229 = vcmask 1041409
    %v230 = vsel %vm229, %v228, %v193
    %v231 = vrot.slane %v195, 6
    %vm232 = vcmask 1042434
    %v233 = vsel %vm232, %v231, %v230
    %v234 = vrot.slane %v196, 5
    %vm235 = vcmask 1043459
    %v236 = vsel %vm235, %v234, %v233
    %v237 = vrot.slane %v197, 4
    %vm238 = vcmask 1044484
    %v239 = vsel %vm238, %v237, %v236
    %v240 = vrot.slane %v198, 3
    %vm241 = vcmask 1045509
    %v242 = vsel %vm241, %v240, %v239
    %v243 = vrot.slane %v199, 2
    %vm244 = vcmask 1046534
    %v245 = vsel %vm244, %v243, %v242
    %v246 = vrot.slane %v200, 1
    %vm247 = vcmask 1047559
    %v248 = vsel %vm247, %v246, %v245
    %vm249 = vcmask 261120
    %v250 = vsel %vm249, %v248, 0
    %v253 = vsel %vm249, %v151, 0
    %v256 = vsel %vm249, %v152, 0
    %v259 = vsel %vm249, %v153, 0
    %v262 = vsel %vm249, %v154, 0
    %264 = vmatpush.xpose.msra.mxu0 0.0
    %265 = vmatpush.xpose.msra.mxu0 0.0
    %266 = vmatpush.xpose.msra.mxu0 0.0
    %267 = vmatpush.xpose.msra.mxu0 0.0
    %268 = vmatpush.xpose.msra.mxu0 0.0
    %269 = vmatpush.xpose.msra.mxu0 0.0
    %270 = vmatpush.xpose.msra.mxu0 0.0
    %271 = vmatpush.xpose.msra.mxu0 0.0
    %272 = vmatpush.xpose.msra.mxu0 0.0
    %273 = vmatpush.xpose.msra.mxu0 0.0
    %274 = vmatpush.xpose.msra.mxu0 0.0
    %275 = vmatpush.xpose.msra.mxu0 0.0
    %276 = vmatpush.xpose.msra.mxu0 %v262
    %277 = vmatpush.xpose.msra.mxu0 %v259
    %278 = vmatpush.xpose.msra.mxu0 %v256
    %279 = vmatpush.xpose.msra.mxu0 %v253
    %280 = vmatmul.f32.gmra.mxu0 %v250
    %v281 = vpop.f32.mrf.mxu0
    %v282 = vadd.f32 %v218, %v281
    %283 = vdwg.mxu0
    %v285 = vperm.slane %v160, 0
    %v295 = vrot.slane %v202, 7
    %v296 = vsel %vm229, %v295, %v201
    %v297 = vrot.slane %v203, 6
    %v298 = vsel %vm232, %v297, %v296
    %v299 = vrot.slane %v204, 5
    %v300 = vsel %vm235, %v299, %v298
    %v301 = vrot.slane %v205, 4
    %v302 = vsel %vm238, %v301, %v300
    %v303 = vrot.slane %v206, 3
    %v304 = vsel %vm241, %v303, %v302
    %v305 = vrot.slane %v207, 2
    %v306 = vsel %vm244, %v305, %v304
    %v307 = vrot.slane %v208, 1
    %v308 = vsel %vm247, %v307, %v306
    %v309 = vsel %vm249, %v308, 0
    %v312 = vsel %vm249, %v156, 0
    %v315 = vsel %vm249, %v157, 0
    %v318 = vsel %vm249, %v158, 0
    %v321 = vsel %vm249, %v159, 0
    %323 = vmatpush.xpose.msra.mxu0 0.0
    %324 = vmatpush.xpose.msra.mxu0 0.0
    %325 = vmatpush.xpose.msra.mxu0 0.0
    %326 = vmatpush.xpose.msra.mxu0 0.0
    %327 = vmatpush.xpose.msra.mxu0 0.0
    %328 = vmatpush.xpose.msra.mxu0 0.0
    %329 = vmatpush.xpose.msra.mxu0 0.0
    %330 = vmatpush.xpose.msra.mxu0 0.0
    %331 = vmatpush.xpose.msra.mxu0 0.0
    %332 = vmatpush.xpose.msra.mxu0 0.0
    %333 = vmatpush.xpose.msra.mxu0 0.0
    %334 = vmatpush.xpose.msra.mxu0 0.0
    %335 = vmatpush.xpose.msra.mxu0 %v321
    %336 = vmatpush.xpose.msra.mxu0 %v318
    %337 = vmatpush.xpose.msra.mxu0 %v315
    %338 = vmatpush.xpose.msra.mxu0 %v312
    %339 = vmatmul.f32.gmra.mxu0 %v309
    %v340 = vpop.f32.mrf.mxu0
    %v341 = vadd.f32 %v285, %v340
    %342 = vdwg.mxu0
    %v344 = vperm.slane %v165, 0
    %v354 = vrot.slane %v210, 7
    %v355 = vsel %vm229, %v354, %v209
    %v356 = vrot.slane %v211, 6
    %v357 = vsel %vm232, %v356, %v355
    %v358 = vrot.slane %v212, 5
    %v359 = vsel %vm235, %v358, %v357
    %v360 = vrot.slane %v213, 4
    %v361 = vsel %vm238, %v360, %v359
    %v362 = vrot.slane %v214, 3
    %v363 = vsel %vm241, %v362, %v361
    %v364 = vrot.slane %v215, 2
    %v365 = vsel %vm244, %v364, %v363
    %v366 = vrot.slane %v216, 1
    %v367 = vsel %vm247, %v366, %v365
    %v368 = vsel %vm249, %v367, 0
    %v371 = vsel %vm249, %v161, 0
    %v374 = vsel %vm249, %v162, 0
    %v377 = vsel %vm249, %v163, 0
    %v380 = vsel %vm249, %v164, 0
    %382 = vmatpush.xpose.msra.mxu0 0.0
    %383 = vmatpush.xpose.msra.mxu0 0.0
    %384 = vmatpush.xpose.msra.mxu0 0.0
    %385 = vmatpush.xpose.msra.mxu0 0.0
    %386 = vmatpush.xpose.msra.mxu0 0.0
    %387 = vmatpush.xpose.msra.mxu0 0.0
    %388 = vmatpush.xpose.msra.mxu0 0.0
    %389 = vmatpush.xpose.msra.mxu0 0.0
    %390 = vmatpush.xpose.msra.mxu0 0.0
    %391 = vmatpush.xpose.msra.mxu0 0.0
    %392 = vmatpush.xpose.msra.mxu0 0.0
    %393 = vmatpush.xpose.msra.mxu0 0.0
    %394 = vmatpush.xpose.msra.mxu0 %v380
    %395 = vmatpush.xpose.msra.mxu0 %v377
    %396 = vmatpush.xpose.msra.mxu0 %v374
    %397 = vmatpush.xpose.msra.mxu0 %v371
    %398 = vmatmul.f32.gmra.mxu0 %v368
    %v399 = vpop.f32.mrf.mxu0
    %v400 = vadd.f32 %v344, %v399
    %401 = vdwg.mxu0
    %v402 = vmul.f32 %v282, %v177
    %v404 = vsel %vm249, %v402, 0
    %v407 = vsel %vm249, %v341, 0
    %409 = vmatpush.xpose.msra.mxu0 0.0
    %410 = vmatpush.xpose.msra.mxu0 0.0
    %411 = vmatpush.xpose.msra.mxu0 0.0
    %412 = vmatpush.xpose.msra.mxu0 0.0
    %413 = vmatpush.xpose.msra.mxu0 0.0
    %414 = vmatpush.xpose.msra.mxu0 0.0
    %415 = vmatpush.xpose.msra.mxu0 0.0
    %416 = vmatpush.xpose.msra.mxu0 0.0
    %417 = vmatpush.xpose.msra.mxu0 0.0
    %418 = vmatpush.xpose.msra.mxu0 0.0
    %419 = vmatpush.xpose.msra.mxu0 0.0
    %420 = vmatpush.xpose.msra.mxu0 0.0
    %421 = vmatpush.xpose.msra.mxu0 0.0
    %422 = vmatpush.xpose.msra.mxu0 0.0
    %423 = vmatpush.xpose.msra.mxu0 0.0
    %424 = vmatpush.xpose.msra.mxu0 %v407
    %425 = vmatmul.f32.gmra.mxu0 %v404
    %v426 = vpop.f32.mrf.mxu0
    %v427 = vadd.f32 0.0, %v426
    %428 = vdwg.mxu0
    %vm429 = vcmask 64512
    %v430 = vsel %vm429, %v427, -inf
    %431 = vmax.xlane.f32.xlu0 %v430
    %v432 = vpop.xlane.xlu0 %431
    %v433 = vsub.f32 %v427, %v432
    %v434 = vmul.f32 %v433, 1.442695
    %v435 = vpow.pop %v434
    %v436 = vsel %vm429, %v435, 0.0
    %437 = vadd.xlane.f32.xlu0 %v436
    %v438 = vpop.xlane.xlu0 %437
    %v439 = vrcp.pop %v438
    %v440 = vmul.f32 %v438, %v439
    %v441 = vsub.f32 1.0, %v440
    %v442 = vmul.f32 %v439, %v441
    %v443 = vadd.f32 %v439, %v442
    %vm444 = vweird.f32 %v438
    %vm445 = vweird.f32 %v439
    %vm446 = vmor %vm444, %vm445
    %v447 = vsel %vm446, %v439, %v443
    %v448 = vand.u32 2147483647, %v438
    %vm449 = vcmp.eq.f32.partialorder %v448, 8.507059e+37
    %v450 = vand.u32 %v438, 2147483648
    %v451 = vor.u32 1.1754944e-38, %v450
    %v452 = vsel %vm449, %v451, %v447
    %v453 = vmul.f32 %v435, %v452
    %v454 = vadd.f32 %v453, 0.0
    %v456 = vsel %vm429, %v453, 0
    %458 = vmatpush.msra.mxu0 0.0
    %459 = vmatpush.msra.mxu0 0.0
    %460 = vmatpush.msra.mxu0 0.0
    %461 = vmatpush.msra.mxu0 0.0
    %462 = vmatpush.msra.mxu0 0.0
    %463 = vmatpush.msra.mxu0 0.0
    %464 = vmatpush.msra.mxu0 0.0
    %465 = vmatpush.msra.mxu0 0.0
    %466 = vmatpush.msra.mxu0 0.0
    %467 = vmatpush.msra.mxu0 0.0
    %468 = vmatpush.msra.mxu0 0.0
    %469 = vmatpush.msra.mxu0 0.0
    %470 = vmatpush.msra.mxu0 0.0
    %471 = vmatpush.msra.mxu0 0.0
    %472 = vmatpush.msra.mxu0 0.0
    %473 = vmatpush.msra.mxu0 %v400
    %474 = vmatmul.f32.gmra.mxu0 %v456
    %v475 = vpop.f32.mrf.mxu0
    %v476 = vadd.f32 0.0, %v475
    %477 = vdwg.mxu0
    %v478 = vmul.f32 %v476, %v177
    %v479 = vadd.f32 %v478, 0.0
    %v480 = vmul.f32 %v282, %v182
    %v482 = vsel %vm249, %v480, 0
    %484 = vmatpush.xpose.msra.mxu0 0.0
    %485 = vmatpush.xpose.msra.mxu0 0.0
    %486 = vmatpush.xpose.msra.mxu0 0.0
    %487 = vmatpush.xpose.msra.mxu0 0.0
    %488 = vmatpush.xpose.msra.mxu0 0.0
    %489 = vmatpush.xpose.msra.mxu0 0.0
    %490 = vmatpush.xpose.msra.mxu0 0.0
    %491 = vmatpush.xpose.msra.mxu0 0.0
    %492 = vmatpush.xpose.msra.mxu0 0.0
    %493 = vmatpush.xpose.msra.mxu0 0.0
    %494 = vmatpush.xpose.msra.mxu0 0.0
    %495 = vmatpush.xpose.msra.mxu0 0.0
    %496 = vmatpush.xpose.msra.mxu0 0.0
    %497 = vmatpush.xpose.msra.mxu0 0.0
    %498 = vmatpush.xpose.msra.mxu0 0.0
    %499 = vmatpush.xpose.msra.mxu0 %v407
    %500 = vmatmul.f32.gmra.mxu0 %v482
    %v501 = vpop.f32.mrf.mxu0
    %v502 = vadd.f32 0.0, %v501
    %503 = vdwg.mxu0
    %v504 = vsel %vm429, %v502, -inf
    %505 = vmax.xlane.f32.xlu0 %v504
    %v506 = vpop.xlane.xlu0 %505
    %v507 = vsub.f32 %v502, %v506
    %v508 = vmul.f32 %v507, 1.442695
    %v509 = vpow.pop %v508
    %v510 = vsel %vm429, %v509, 0.0
    %511 = vadd.xlane.f32.xlu0 %v510
    %v512 = vpop.xlane.xlu0 %511
    %v513 = vrcp.pop %v512
    %v514 = vmul.f32 %v512, %v513
    %v515 = vsub.f32 1.0, %v514
    %v516 = vmul.f32 %v513, %v515
    %v517 = vadd.f32 %v513, %v516
    %vm518 = vweird.f32 %v512
    %vm519 = vweird.f32 %v513
    %vm520 = vmor %vm518, %vm519
    %v521 = vsel %vm520, %v513, %v517
    %v522 = vand.u32 2147483647, %v512
    %vm523 = vcmp.eq.f32.partialorder %v522, 8.507059e+37
    %v524 = vand.u32 %v512, 2147483648
    %v525 = vor.u32 1.1754944e-38, %v524
    %v526 = vsel %vm523, %v525, %v521
    %v527 = vmul.f32 %v509, %v526
    %v528 = vadd.f32 %v454, %v527
    %v530 = vsel %vm429, %v527, 0
    %532 = vmatpush.msra.mxu0 0.0
    %533 = vmatpush.msra.mxu0 0.0
    %534 = vmatpush.msra.mxu0 0.0
    %535 = vmatpush.msra.mxu0 0.0
    %536 = vmatpush.msra.mxu0 0.0
    %537 = vmatpush.msra.mxu0 0.0
    %538 = vmatpush.msra.mxu0 0.0
    %539 = vmatpush.msra.mxu0 0.0
    %540 = vmatpush.msra.mxu0 0.0
    %541 = vmatpush.msra.mxu0 0.0
    %542 = vmatpush.msra.mxu0 0.0
    %543 = vmatpush.msra.mxu0 0.0
    %544 = vmatpush.msra.mxu0 0.0
    %545 = vmatpush.msra.mxu0 0.0
    %546 = vmatpush.msra.mxu0 0.0
    %547 = vmatpush.msra.mxu0 %v400
    %548 = vmatmul.f32.gmra.mxu0 %v530
    %v549 = vpop.f32.mrf.mxu0
    %v550 = vadd.f32 0.0, %v549
    %551 = vdwg.mxu0
    %v552 = vmul.f32 %v550, %v182
    %v553 = vadd.f32 %v479, %v552
    %v554 = vmul.f32 %v282, %v187
    %v556 = vsel %vm249, %v554, 0
    %558 = vmatpush.xpose.msra.mxu0 0.0
    %559 = vmatpush.xpose.msra.mxu0 0.0
    %560 = vmatpush.xpose.msra.mxu0 0.0
    %561 = vmatpush.xpose.msra.mxu0 0.0
    %562 = vmatpush.xpose.msra.mxu0 0.0
    %563 = vmatpush.xpose.msra.mxu0 0.0
    %564 = vmatpush.xpose.msra.mxu0 0.0
    %565 = vmatpush.xpose.msra.mxu0 0.0
    %566 = vmatpush.xpose.msra.mxu0 0.0
    %567 = vmatpush.xpose.msra.mxu0 0.0
    %568 = vmatpush.xpose.msra.mxu0 0.0
    %569 = vmatpush.xpose.msra.mxu0 0.0
    %570 = vmatpush.xpose.msra.mxu0 0.0
    %571 = vmatpush.xpose.msra.mxu0 0.0
    %572 = vmatpush.xpose.msra.mxu0 0.0
    %573 = vmatpush.xpose.msra.mxu0 %v407
    %574 = vmatmul.f32.gmra.mxu0 %v556
    %v575 = vpop.f32.mrf.mxu0
    %v576 = vadd.f32 0.0, %v575
    %577 = vdwg.mxu0
    %v578 = vsel %vm429, %v576, -inf
    %579 = vmax.xlane.f32.xlu0 %v578
    %v580 = vpop.xlane.xlu0 %579
    %v581 = vsub.f32 %v576, %v580
    %v582 = vmul.f32 %v581, 1.442695
    %v583 = vpow.pop %v582
    %v584 = vsel %vm429, %v583, 0.0
    %585 = vadd.xlane.f32.xlu0 %v584
    %v586 = vpop.xlane.xlu0 %585
    %v587 = vrcp.pop %v586
    %v588 = vmul.f32 %v586, %v587
    %v589 = vsub.f32 1.0, %v588
    %v590 = vmul.f32 %v587, %v589
    %v591 = vadd.f32 %v587, %v590
    %vm592 = vweird.f32 %v586
    %vm593 = vweird.f32 %v587
    %vm594 = vmor %vm592, %vm593
    %v595 = vsel %vm594, %v587, %v591
    %v596 = vand.u32 2147483647, %v586
    %vm597 = vcmp.eq.f32.partialorder %v596, 8.507059e+37
    %v598 = vand.u32 %v586, 2147483648
    %v599 = vor.u32 1.1754944e-38, %v598
    %v600 = vsel %vm597, %v599, %v595
    %v601 = vmul.f32 %v583, %v600
    %v602 = vadd.f32 %v528, %v601
    %v604 = vsel %vm429, %v601, 0
    %606 = vmatpush.msra.mxu0 0.0
    %607 = vmatpush.msra.mxu0 0.0
    %608 = vmatpush.msra.mxu0 0.0
    %609 = vmatpush.msra.mxu0 0.0
    %610 = vmatpush.msra.mxu0 0.0
    %611 = vmatpush.msra.mxu0 0.0
    %612 = vmatpush.msra.mxu0 0.0
    %613 = vmatpush.msra.mxu0 0.0
    %614 = vmatpush.msra.mxu0 0.0
    %615 = vmatpush.msra.mxu0 0.0
    %616 = vmatpush.msra.mxu0 0.0
    %617 = vmatpush.msra.mxu0 0.0
    %618 = vmatpush.msra.mxu0 0.0
    %619 = vmatpush.msra.mxu0 0.0
    %620 = vmatpush.msra.mxu0 0.0
    %621 = vmatpush.msra.mxu0 %v400
    %622 = vmatmul.f32.gmra.mxu0 %v604
    %v623 = vpop.f32.mrf.mxu0
    %v624 = vadd.f32 0.0, %v623
    %625 = vdwg.mxu0
    %v626 = vmul.f32 %v624, %v187
    %v627 = vadd.f32 %v553, %v626
    %v628 = vmul.f32 %v282, %v192
    %v630 = vsel %vm249, %v628, 0
    %632 = vmatpush.xpose.msra.mxu0 0.0
    %633 = vmatpush.xpose.msra.mxu0 0.0
    %634 = vmatpush.xpose.msra.mxu0 0.0
    %635 = vmatpush.xpose.msra.mxu0 0.0
    %636 = vmatpush.xpose.msra.mxu0 0.0
    %637 = vmatpush.xpose.msra.mxu0 0.0
    %638 = vmatpush.xpose.msra.mxu0 0.0
    %639 = vmatpush.xpose.msra.mxu0 0.0
    %640 = vmatpush.xpose.msra.mxu0 0.0
    %641 = vmatpush.xpose.msra.mxu0 0.0
    %642 = vmatpush.xpose.msra.mxu0 0.0
    %643 = vmatpush.xpose.msra.mxu0 0.0
    %644 = vmatpush.xpose.msra.mxu0 0.0
    %645 = vmatpush.xpose.msra.mxu0 0.0
    %646 = vmatpush.xpose.msra.mxu0 0.0
    %647 = vmatpush.xpose.msra.mxu0 %v407
    %648 = vmatmul.f32.gmra.mxu0 %v630
    %v649 = vpop.f32.mrf.mxu0
    %v650 = vadd.f32 0.0, %v649
    %651 = vdwg.mxu0
    %v652 = vsel %vm429, %v650, -inf
    %653 = vmax.xlane.f32.xlu0 %v652
    %v654 = vpop.xlane.xlu0 %653
    %v655 = vsub.f32 %v650, %v654
    %v656 = vmul.f32 %v655, 1.442695
    %v657 = vpow.pop %v656
    %v658 = vsel %vm429, %v657, 0.0
    %659 = vadd.xlane.f32.xlu0 %v658
    %v660 = vpop.xlane.xlu0 %659
    %v661 = vrcp.pop %v660
    %v662 = vmul.f32 %v660, %v661
    %v663 = vsub.f32 1.0, %v662
    %v664 = vmul.f32 %v661, %v663
    %v665 = vadd.f32 %v661, %v664
    %vm666 = vweird.f32 %v660
    %vm667 = vweird.f32 %v661
    %vm668 = vmor %vm666, %vm667
    %v669 = vsel %vm668, %v661, %v665
    %v670 = vand.u32 2147483647, %v660
    %vm671 = vcmp.eq.f32.partialorder %v670, 8.507059e+37
    %v672 = vand.u32 %v660, 2147483648
    %v673 = vor.u32 1.1754944e-38, %v672
    %v674 = vsel %vm671, %v673, %v669
    %v675 = vmul.f32 %v657, %v674
    %v676 = vadd.f32 %v602, %v675
    %v678 = vsel %vm429, %v675, 0
    %680 = vmatpush.msra.mxu0 0.0
    %681 = vmatpush.msra.mxu0 0.0
    %682 = vmatpush.msra.mxu0 0.0
    %683 = vmatpush.msra.mxu0 0.0
    %684 = vmatpush.msra.mxu0 0.0
    %685 = vmatpush.msra.mxu0 0.0
    %686 = vmatpush.msra.mxu0 0.0
    %687 = vmatpush.msra.mxu0 0.0
    %688 = vmatpush.msra.mxu0 0.0
    %689 = vmatpush.msra.mxu0 0.0
    %690 = vmatpush.msra.mxu0 0.0
    %691 = vmatpush.msra.mxu0 0.0
    %692 = vmatpush.msra.mxu0 0.0
    %693 = vmatpush.msra.mxu0 0.0
    %694 = vmatpush.msra.mxu0 0.0
    %695 = vmatpush.msra.mxu0 %v400
    %696 = vmatmul.f32.gmra.mxu0 %v678
    %v697 = vpop.f32.mrf.mxu0
    %v698 = vadd.f32 0.0, %v697
    %699 = vdwg.mxu0
    %v700 = vmul.f32 %v698, %v192
    %v701 = vadd.f32 %v627, %v700
    %v703 = vperm.slane %v170, 0
    %v706 = vsel %vm249, %v701, 0
    %v709 = vsel %vm249, %v166, 0
    %v712 = vsel %vm249, %v167, 0
    %v715 = vsel %vm249, %v168, 0
    %v718 = vsel %vm249, %v169, 0
    %720 = vmatpush.xpose.msra.mxu0 0.0
    %721 = vmatpush.xpose.msra.mxu0 0.0
    %722 = vmatpush.xpose.msra.mxu0 0.0
    %723 = vmatpush.xpose.msra.mxu0 0.0
    %724 = vmatpush.xpose.msra.mxu0 0.0
    %725 = vmatpush.xpose.msra.mxu0 0.0
    %726 = vmatpush.xpose.msra.mxu0 0.0
    %727 = vmatpush.xpose.msra.mxu0 0.0
    %728 = vmatpush.xpose.msra.mxu0 0.0
    %729 = vmatpush.xpose.msra.mxu0 0.0
    %730 = vmatpush.xpose.msra.mxu0 0.0
    %731 = vmatpush.xpose.msra.mxu0 0.0
    %732 = vmatpush.xpose.msra.mxu0 %v718
    %733 = vmatpush.xpose.msra.mxu0 %v715
    %734 = vmatpush.xpose.msra.mxu0 %v712
    %735 = vmatpush.xpose.msra.mxu0 %v709
    %736 = vmatmul.f32.gmra.mxu0 %v706
    %v737 = vpop.f32.mrf.mxu0
    %v738 = vadd.f32 %v703, %v737
    %739 = vdwg.mxu0
    %v741 = vrot.slane %v738, 1
    %v742 = vrot.slane %v738, 2
    %v743 = vrot.slane %v738, 3
    %v744 = vrot.slane %v738, 4
    %v745 = vrot.slane %v738, 5
    %v746 = vrot.slane %v738, 6
    %v747 = vrot.slane %v738, 7
    %vm755 = vcmask 253952
    %756 = vst.msk [vmem:[#allocation14] sm:$0x1] %vm755, %v738
    %757 = vst.msk [vmem:[#allocation14 + $0x2] sm:$0x1] %vm755, %v741
    %758 = vst.msk [vmem:[#allocation14 + $0x4] sm:$0x1] %vm755, %v742
    %759 = vst.msk [vmem:[#allocation14 + $0x6] sm:$0x1] %vm755, %v743
    %760 = vst.msk [vmem:[#allocation14 + $0x8] sm:$0x1] %vm755, %v744
    %761 = vst.msk [vmem:[#allocation14 + $0xa] sm:$0x1] %vm755, %v745
    %762 = vst.msk [vmem:[#allocation14 + $0xc] sm:$0x1] %vm755, %v746
    %763 = vst.msk [vmem:[#allocation14 + $0xe] sm:$0x1] %vm755, %v747
    %v764 = vmul.f32 %v676, 0.25
    %765 = vst.msk [vmem:[#allocation15] sm:$0xff] %vm429, %v764
    %v766 = vld [vmem:[#allocation2 + $0x1] sm:$0x1]
    %v767 = vld [vmem:[#allocation2 + $0x3] sm:$0x1]
    %v768 = vld [vmem:[#allocation2 + $0x5] sm:$0x1]
    %v769 = vld [vmem:[#allocation2 + $0x7] sm:$0x1]
    %v770 = vld [vmem:[#allocation2 + $0x9] sm:$0x1]
    %v771 = vld [vmem:[#allocation2 + $0xb] sm:$0x1]
    %v772 = vld [vmem:[#allocation2 + $0xd] sm:$0x1]
    %v773 = vld [vmem:[#allocation2 + $0xf] sm:$0x1]
    %v774 = vld [vmem:[#allocation5 + $0x1] sm:$0x1]
    %v775 = vld [vmem:[#allocation5 + $0x3] sm:$0x1]
    %v776 = vld [vmem:[#allocation5 + $0x5] sm:$0x1]
    %v777 = vld [vmem:[#allocation5 + $0x7] sm:$0x1]
    %v778 = vld [vmem:[#allocation5 + $0x9] sm:$0x1]
    %v779 = vld [vmem:[#allocation5 + $0xb] sm:$0x1]
    %v780 = vld [vmem:[#allocation5 + $0xd] sm:$0x1]
    %v781 = vld [vmem:[#allocation5 + $0xf] sm:$0x1]
    %v782 = vld [vmem:[#allocation7 + $0x1] sm:$0x1]
    %v783 = vld [vmem:[#allocation7 + $0x3] sm:$0x1]
    %v784 = vld [vmem:[#allocation7 + $0x5] sm:$0x1]
    %v785 = vld [vmem:[#allocation7 + $0x7] sm:$0x1]
    %v786 = vld [vmem:[#allocation7 + $0x9] sm:$0x1]
    %v787 = vld [vmem:[#allocation7 + $0xb] sm:$0x1]
    %v788 = vld [vmem:[#allocation7 + $0xd] sm:$0x1]
    %v789 = vld [vmem:[#allocation7 + $0xf] sm:$0x1]
    %v798 = vrot.slane %v767, 7
    %v799 = vsel %vm229, %v798, %v766
    %v800 = vrot.slane %v768, 6
    %v801 = vsel %vm232, %v800, %v799
    %v802 = vrot.slane %v769, 5
    %v803 = vsel %vm235, %v802, %v801
    %v804 = vrot.slane %v770, 4
    %v805 = vsel %vm238, %v804, %v803
    %v806 = vrot.slane %v771, 3
    %v807 = vsel %vm241, %v806, %v805
    %v808 = vrot.slane %v772, 2
    %v809 = vsel %vm244, %v808, %v807
    %v810 = vrot.slane %v773, 1
    %v811 = vsel %vm247, %v810, %v809
    %v812 = vsel %vm249, %v811, 0
    %814 = vmatpush.xpose.msra.mxu0 0.0
    %815 = vmatpush.xpose.msra.mxu0 0.0
    %816 = vmatpush.xpose.msra.mxu0 0.0
    %817 = vmatpush.xpose.msra.mxu0 0.0
    %818 = vmatpush.xpose.msra.mxu0 0.0
    %819 = vmatpush.xpose.msra.mxu0 0.0
    %820 = vmatpush.xpose.msra.mxu0 0.0
    %821 = vmatpush.xpose.msra.mxu0 0.0
    %822 = vmatpush.xpose.msra.mxu0 0.0
    %823 = vmatpush.xpose.msra.mxu0 0.0
    %824 = vmatpush.xpose.msra.mxu0 0.0
    %825 = vmatpush.xpose.msra.mxu0 0.0
    %826 = vmatpush.xpose.msra.mxu0 %v262
    %827 = vmatpush.xpose.msra.mxu0 %v259
    %828 = vmatpush.xpose.msra.mxu0 %v256
    %829 = vmatpush.xpose.msra.mxu0 %v253
    %830 = vmatmul.f32.gmra.mxu0 %v812
    %v831 = vpop.f32.mrf.mxu0
    %v832 = vadd.f32 %v218, %v831
    %833 = vdwg.mxu0
    %v842 = vrot.slane %v775, 7
    %v843 = vsel %vm229, %v842, %v774
    %v844 = vrot.slane %v776, 6
    %v845 = vsel %vm232, %v844, %v843
    %v846 = vrot.slane %v777, 5
    %v847 = vsel %vm235, %v846, %v845
    %v848 = vrot.slane %v778, 4
    %v849 = vsel %vm238, %v848, %v847
    %v850 = vrot.slane %v779, 3
    %v851 = vsel %vm241, %v850, %v849
    %v852 = vrot.slane %v780, 2
    %v853 = vsel %vm244, %v852, %v851
    %v854 = vrot.slane %v781, 1
    %v855 = vsel %vm247, %v854, %v853
    %v856 = vsel %vm249, %v855, 0
    %858 = vmatpush.xpose.msra.mxu0 0.0
    %859 = vmatpush.xpose.msra.mxu0 0.0
    %860 = vmatpush.xpose.msra.mxu0 0.0
    %861 = vmatpush.xpose.msra.mxu0 0.0
    %862 = vmatpush.xpose.msra.mxu0 0.0
    %863 = vmatpush.xpose.msra.mxu0 0.0
    %864 = vmatpush.xpose.msra.mxu0 0.0
    %865 = vmatpush.xpose.msra.mxu0 0.0
    %866 = vmatpush.xpose.msra.mxu0 0.0
    %867 = vmatpush.xpose.msra.mxu0 0.0
    %868 = vmatpush.xpose.msra.mxu0 0.0
    %869 = vmatpush.xpose.msra.mxu0 0.0
    %870 = vmatpush.xpose.msra.mxu0 %v321
    %871 = vmatpush.xpose.msra.mxu0 %v318
    %872 = vmatpush.xpose.msra.mxu0 %v315
    %873 = vmatpush.xpose.msra.mxu0 %v312
    %874 = vmatmul.f32.gmra.mxu0 %v856
    %v875 = vpop.f32.mrf.mxu0
    %v876 = vadd.f32 %v285, %v875
    %877 = vdwg.mxu0
    %v886 = vrot.slane %v783, 7
    %v887 = vsel %vm229, %v886, %v782
    %v888 = vrot.slane %v784, 6
    %v889 = vsel %vm232, %v888, %v887
    %v890 = vrot.slane %v785, 5
    %v891 = vsel %vm235, %v890, %v889
    %v892 = vrot.slane %v786, 4
    %v893 = vsel %vm238, %v892, %v891
    %v894 = vrot.slane %v787, 3
    %v895 = vsel %vm241, %v894, %v893
    %v896 = vrot.slane %v788, 2
    %v897 = vsel %vm244, %v896, %v895
    %v898 = vrot.slane %v789, 1
    %v899 = vsel %vm247, %v898, %v897
    %v900 = vsel %vm249, %v899, 0
    %902 = vmatpush.xpose.msra.mxu0 0.0
    %903 = vmatpush.xpose.msra.mxu0 0.0
    %904 = vmatpush.xpose.msra.mxu0 0.0
    %905 = vmatpush.xpose.msra.mxu0 0.0
    %906 = vmatpush.xpose.msra.mxu0 0.0
    %907 = vmatpush.xpose.msra.mxu0 0.0
    %908 = vmatpush.xpose.msra.mxu0 0.0
    %909 = vmatpush.xpose.msra.mxu0 0.0
    %910 = vmatpush.xpose.msra.mxu0 0.0
    %911 = vmatpush.xpose.msra.mxu0 0.0
    %912 = vmatpush.xpose.msra.mxu0 0.0
    %913 = vmatpush.xpose.msra.mxu0 0.0
    %914 = vmatpush.xpose.msra.mxu0 %v380
    %915 = vmatpush.xpose.msra.mxu0 %v377
    %916 = vmatpush.xpose.msra.mxu0 %v374
    %917 = vmatpush.xpose.msra.mxu0 %v371
    %918 = vmatmul.f32.gmra.mxu0 %v900
    %v919 = vpop.f32.mrf.mxu0
    %v920 = vadd.f32 %v344, %v919
    %921 = vdwg.mxu0
    %v922 = vmul.f32 %v832, %v177
    %v924 = vsel %vm249, %v922, 0
    %v927 = vsel %vm249, %v876, 0
    %929 = vmatpush.xpose.msra.mxu0 0.0
    %930 = vmatpush.xpose.msra.mxu0 0.0
    %931 = vmatpush.xpose.msra.mxu0 0.0
    %932 = vmatpush.xpose.msra.mxu0 0.0
    %933 = vmatpush.xpose.msra.mxu0 0.0
    %934 = vmatpush.xpose.msra.mxu0 0.0
    %935 = vmatpush.xpose.msra.mxu0 0.0
    %936 = vmatpush.xpose.msra.mxu0 0.0
    %937 = vmatpush.xpose.msra.mxu0 0.0
    %938 = vmatpush.xpose.msra.mxu0 0.0
    %939 = vmatpush.xpose.msra.mxu0 0.0
    %940 = vmatpush.xpose.msra.mxu0 0.0
    %941 = vmatpush.xpose.msra.mxu0 0.0
    %942 = vmatpush.xpose.msra.mxu0 0.0
    %943 = vmatpush.xpose.msra.mxu0 0.0
    %944 = vmatpush.xpose.msra.mxu0 %v927
    %945 = vmatmul.f32.gmra.mxu0 %v924
    %v946 = vpop.f32.mrf.mxu0
    %v947 = vadd.f32 0.0, %v946
    %948 = vdwg.mxu0
    %v949 = vsel %vm429, %v947, -inf
    %950 = vmax.xlane.f32.xlu0 %v949
    %v951 = vpop.xlane.xlu0 %950
    %v952 = vsub.f32 %v947, %v951
    %v953 = vmul.f32 %v952, 1.442695
    %v954 = vpow.pop %v953
    %v955 = vsel %vm429, %v954, 0.0
    %956 = vadd.xlane.f32.xlu0 %v955
    %v957 = vpop.xlane.xlu0 %956
    %v958 = vrcp.pop %v957
    %v959 = vmul.f32 %v957, %v958
    %v960 = vsub.f32 1.0, %v959
    %v961 = vmul.f32 %v958, %v960
    %v962 = vadd.f32 %v958, %v961
    %vm963 = vweird.f32 %v957
    %vm964 = vweird.f32 %v958
    %vm965 = vmor %vm963, %vm964
    %v966 = vsel %vm965, %v958, %v962
    %v967 = vand.u32 2147483647, %v957
    %vm968 = vcmp.eq.f32.partialorder %v967, 8.507059e+37
    %v969 = vand.u32 %v957, 2147483648
    %v970 = vor.u32 1.1754944e-38, %v969
    %v971 = vsel %vm968, %v970, %v966
    %v972 = vmul.f32 %v954, %v971
    %v973 = vadd.f32 %v972, 0.0
    %v975 = vsel %vm429, %v972, 0
    %977 = vmatpush.msra.mxu0 0.0
    %978 = vmatpush.msra.mxu0 0.0
    %979 = vmatpush.msra.mxu0 0.0
    %980 = vmatpush.msra.mxu0 0.0
    %981 = vmatpush.msra.mxu0 0.0
    %982 = vmatpush.msra.mxu0 0.0
    %983 = vmatpush.msra.mxu0 0.0
    %984 = vmatpush.msra.mxu0 0.0
    %985 = vmatpush.msra.mxu0 0.0
    %986 = vmatpush.msra.mxu0 0.0
    %987 = vmatpush.msra.mxu0 0.0
    %988 = vmatpush.msra.mxu0 0.0
    %989 = vmatpush.msra.mxu0 0.0
    %990 = vmatpush.msra.mxu0 0.0
    %991 = vmatpush.msra.mxu0 0.0
    %992 = vmatpush.msra.mxu0 %v920
    %993 = vmatmul.f32.gmra.mxu0 %v975
    %v994 = vpop.f32.mrf.mxu0
    %v995 = vadd.f32 0.0, %v994
    %996 = vdwg.mxu0
    %v997 = vmul.f32 %v995, %v177
    %v998 = vadd.f32 %v997, 0.0
    %v999 = vmul.f32 %v832, %v182
    %v1001 = vsel %vm249, %v999, 0
    %1003 = vmatpush.xpose.msra.mxu0 0.0
    %1004 = vmatpush.xpose.msra.mxu0 0.0
    %1005 = vmatpush.xpose.msra.mxu0 0.0
    %1006 = vmatpush.xpose.msra.mxu0 0.0
    %1007 = vmatpush.xpose.msra.mxu0 0.0
    %1008 = vmatpush.xpose.msra.mxu0 0.0
    %1009 = vmatpush.xpose.msra.mxu0 0.0
    %1010 = vmatpush.xpose.msra.mxu0 0.0
    %1011 = vmatpush.xpose.msra.mxu0 0.0
    %1012 = vmatpush.xpose.msra.mxu0 0.0
    %1013 = vmatpush.xpose.msra.mxu0 0.0
    %1014 = vmatpush.xpose.msra.mxu0 0.0
    %1015 = vmatpush.xpose.msra.mxu0 0.0
    %1016 = vmatpush.xpose.msra.mxu0 0.0
    %1017 = vmatpush.xpose.msra.mxu0 0.0
    %1018 = vmatpush.xpose.msra.mxu0 %v927
    %1019 = vmatmul.f32.gmra.mxu0 %v1001
    %v1020 = vpop.f32.mrf.mxu0
    %v1021 = vadd.f32 0.0, %v1020
    %1022 = vdwg.mxu0
    %v1023 = vsel %vm429, %v1021, -inf
    %1024 = vmax.xlane.f32.xlu0 %v1023
    %v1025 = vpop.xlane.xlu0 %1024
    %v1026 = vsub.f32 %v1021, %v1025
    %v1027 = vmul.f32 %v1026, 1.442695
    %v1028 = vpow.pop %v1027
    %v1029 = vsel %vm429, %v1028, 0.0
    %1030 = vadd.xlane.f32.xlu0 %v1029
    %v1031 = vpop.xlane.xlu0 %1030
    %v1032 = vrcp.pop %v1031
    %v1033 = vmul.f32 %v1031, %v1032
    %v1034 = vsub.f32 1.0, %v1033
    %v1035 = vmul.f32 %v1032, %v1034
    %v1036 = vadd.f32 %v1032, %v1035
    %vm1037 = vweird.f32 %v1031
    %vm1038 = vweird.f32 %v1032
    %vm1039 = vmor %vm1037, %vm1038
    %v1040 = vsel %vm1039, %v1032, %v1036
    %v1041 = vand.u32 2147483647, %v1031
    %vm1042 = vcmp.eq.f32.partialorder %v1041, 8.507059e+37
    %v1043 = vand.u32 %v1031, 2147483648
    %v1044 = vor.u32 1.1754944e-38, %v1043
    %v1045 = vsel %vm1042, %v1044, %v1040
    %v1046 = vmul.f32 %v1028, %v1045
    %v1047 = vadd.f32 %v973, %v1046
    %v1049 = vsel %vm429, %v1046, 0
    %1051 = vmatpush.msra.mxu0 0.0
    %1052 = vmatpush.msra.mxu0 0.0
    %1053 = vmatpush.msra.mxu0 0.0
    %1054 = vmatpush.msra.mxu0 0.0
    %1055 = vmatpush.msra.mxu0 0.0
    %1056 = vmatpush.msra.mxu0 0.0
    %1057 = vmatpush.msra.mxu0 0.0
    %1058 = vmatpush.msra.mxu0 0.0
    %1059 = vmatpush.msra.mxu0 0.0
    %1060 = vmatpush.msra.mxu0 0.0
    %1061 = vmatpush.msra.mxu0 0.0
    %1062 = vmatpush.msra.mxu0 0.0
    %1063 = vmatpush.msra.mxu0 0.0
    %1064 = vmatpush.msra.mxu0 0.0
    %1065 = vmatpush.msra.mxu0 0.0
    %1066 = vmatpush.msra.mxu0 %v920
    %1067 = vmatmul.f32.gmra.mxu0 %v1049
    %v1068 = vpop.f32.mrf.mxu0
    %v1069 = vadd.f32 0.0, %v1068
    %1070 = vdwg.mxu0
    %v1071 = vmul.f32 %v1069, %v182
    %v1072 = vadd.f32 %v998, %v1071
    %v1073 = vmul.f32 %v832, %v187
    %v1075 = vsel %vm249, %v1073, 0
    %1077 = vmatpush.xpose.msra.mxu0 0.0
    %1078 = vmatpush.xpose.msra.mxu0 0.0
    %1079 = vmatpush.xpose.msra.mxu0 0.0
    %1080 = vmatpush.xpose.msra.mxu0 0.0
    %1081 = vmatpush.xpose.msra.mxu0 0.0
    %1082 = vmatpush.xpose.msra.mxu0 0.0
    %1083 = vmatpush.xpose.msra.mxu0 0.0
    %1084 = vmatpush.xpose.msra.mxu0 0.0
    %1085 = vmatpush.xpose.msra.mxu0 0.0
    %1086 = vmatpush.xpose.msra.mxu0 0.0
    %1087 = vmatpush.xpose.msra.mxu0 0.0
    %1088 = vmatpush.xpose.msra.mxu0 0.0
    %1089 = vmatpush.xpose.msra.mxu0 0.0
    %1090 = vmatpush.xpose.msra.mxu0 0.0
    %1091 = vmatpush.xpose.msra.mxu0 0.0
    %1092 = vmatpush.xpose.msra.mxu0 %v927
    %1093 = vmatmul.f32.gmra.mxu0 %v1075
    %v1094 = vpop.f32.mrf.mxu0
    %v1095 = vadd.f32 0.0, %v1094
    %1096 = vdwg.mxu0
    %v1097 = vsel %vm429, %v1095, -inf
    %1098 = vmax.xlane.f32.xlu0 %v1097
    %v1099 = vpop.xlane.xlu0 %1098
    %v1100 = vsub.f32 %v1095, %v1099
    %v1101 = vmul.f32 %v1100, 1.442695
    %v1102 = vpow.pop %v1101
    %v1103 = vsel %vm429, %v1102, 0.0
    %1104 = vadd.xlane.f32.xlu0 %v1103
    %v1105 = vpop.xlane.xlu0 %1104
    %v1106 = vrcp.pop %v1105
    %v1107 = vmul.f32 %v1105, %v1106
    %v1108 = vsub.f32 1.0, %v1107
    %v1109 = vmul.f32 %v1106, %v1108
    %v1110 = vadd.f32 %v1106, %v1109
    %vm1111 = vweird.f32 %v1105
    %vm1112 = vweird.f32 %v1106
    %vm1113 = vmor %vm1111, %vm1112
    %v1114 = vsel %vm1113, %v1106, %v1110
    %v1115 = vand.u32 2147483647, %v1105
    %vm1116 = vcmp.eq.f32.partialorder %v1115, 8.507059e+37
    %v1117 = vand.u32 %v1105, 2147483648
    %v1118 = vor.u32 1.1754944e-38, %v1117
    %v1119 = vsel %vm1116, %v1118, %v1114
    %v1120 = vmul.f32 %v1102, %v1119
    %v1121 = vadd.f32 %v1047, %v1120
    %v1123 = vsel %vm429, %v1120, 0
    %1125 = vmatpush.msra.mxu0 0.0
    %1126 = vmatpush.msra.mxu0 0.0
    %1127 = vmatpush.msra.mxu0 0.0
    %1128 = vmatpush.msra.mxu0 0.0
    %1129 = vmatpush.msra.mxu0 0.0
    %1130 = vmatpush.msra.mxu0 0.0
    %1131 = vmatpush.msra.mxu0 0.0
    %1132 = vmatpush.msra.mxu0 0.0
    %1133 = vmatpush.msra.mxu0 0.0
    %1134 = vmatpush.msra.mxu0 0.0
    %1135 = vmatpush.msra.mxu0 0.0
    %1136 = vmatpush.msra.mxu0 0.0
    %1137 = vmatpush.msra.mxu0 0.0
    %1138 = vmatpush.msra.mxu0 0.0
    %1139 = vmatpush.msra.mxu0 0.0
    %1140 = vmatpush.msra.mxu0 %v920
    %1141 = vmatmul.f32.gmra.mxu0 %v1123
    %v1142 = vpop.f32.mrf.mxu0
    %v1143 = vadd.f32 0.0, %v1142
    %1144 = vdwg.mxu0
    %v1145 = vmul.f32 %v1143, %v187
    %v1146 = vadd.f32 %v1072, %v1145
    %v1147 = vmul.f32 %v832, %v192
    %v1149 = vsel %vm249, %v1147, 0
    %1151 = vmatpush.xpose.msra.mxu0 0.0
    %1152 = vmatpush.xpose.msra.mxu0 0.0
    %1153 = vmatpush.xpose.msra.mxu0 0.0
    %1154 = vmatpush.xpose.msra.mxu0 0.0
    %1155 = vmatpush.xpose.msra.mxu0 0.0
    %1156 = vmatpush.xpose.msra.mxu0 0.0
    %1157 = vmatpush.xpose.msra.mxu0 0.0
    %1158 = vmatpush.xpose.msra.mxu0 0.0
    %1159 = vmatpush.xpose.msra.mxu0 0.0
    %1160 = vmatpush.xpose.msra.mxu0 0.0
    %1161 = vmatpush.xpose.msra.mxu0 0.0
    %1162 = vmatpush.xpose.msra.mxu0 0.0
    %1163 = vmatpush.xpose.msra.mxu0 0.0
    %1164 = vmatpush.xpose.msra.mxu0 0.0
    %1165 = vmatpush.xpose.msra.mxu0 0.0
    %1166 = vmatpush.xpose.msra.mxu0 %v927
    %1167 = vmatmul.f32.gmra.mxu0 %v1149
    %v1168 = vpop.f32.mrf.mxu0
    %v1169 = vadd.f32 0.0, %v1168
    %1170 = vdwg.mxu0
    %v1171 = vsel %vm429, %v1169, -inf
    %1172 = vmax.xlane.f32.xlu0 %v1171
    %v1173 = vpop.xlane.xlu0 %1172
    %v1174 = vsub.f32 %v1169, %v1173
    %v1175 = vmul.f32 %v1174, 1.442695
    %v1176 = vpow.pop %v1175
    %v1177 = vsel %vm429, %v1176, 0.0
    %1178 = vadd.xlane.f32.xlu0 %v1177
    %v1179 = vpop.xlane.xlu0 %1178
    %v1180 = vrcp.pop %v1179
    %v1181 = vmul.f32 %v1179, %v1180
    %v1182 = vsub.f32 1.0, %v1181
    %v1183 = vmul.f32 %v1180, %v1182
    %v1184 = vadd.f32 %v1180, %v1183
    %vm1185 = vweird.f32 %v1179
    %vm1186 = vweird.f32 %v1180
    %vm1187 = vmor %vm1185, %vm1186
    %v1188 = vsel %vm1187, %v1180, %v1184
    %v1189 = vand.u32 2147483647, %v1179
    %vm1190 = vcmp.eq.f32.partialorder %v1189, 8.507059e+37
    %v1191 = vand.u32 %v1179, 2147483648
    %v1192 = vor.u32 1.1754944e-38, %v1191
    %v1193 = vsel %vm1190, %v1192, %v1188
    %v1194 = vmul.f32 %v1176, %v1193
    %v1195 = vadd.f32 %v1121, %v1194
    %v1197 = vsel %vm429, %v1194, 0
    %1199 = vmatpush.msra.mxu0 0.0
    %1200 = vmatpush.msra.mxu0 0.0
    %1201 = vmatpush.msra.mxu0 0.0
    %1202 = vmatpush.msra.mxu0 0.0
    %1203 = vmatpush.msra.mxu0 0.0
    %1204 = vmatpush.msra.mxu0 0.0
    %1205 = vmatpush.msra.mxu0 0.0
    %1206 = vmatpush.msra.mxu0 0.0
    %1207 = vmatpush.msra.mxu0 0.0
    %1208 = vmatpush.msra.mxu0 0.0
    %1209 = vmatpush.msra.mxu0 0.0
    %1210 = vmatpush.msra.mxu0 0.0
    %1211 = vmatpush.msra.mxu0 0.0
    %1212 = vmatpush.msra.mxu0 0.0
    %1213 = vmatpush.msra.mxu0 0.0
    %1214 = vmatpush.msra.mxu0 %v920
    %1215 = vmatmul.f32.gmra.mxu0 %v1197
    %v1216 = vpop.f32.mrf.mxu0
    %v1217 = vadd.f32 0.0, %v1216
    %1218 = vdwg.mxu0
    %v1219 = vmul.f32 %v1217, %v192
    %v1220 = vadd.f32 %v1146, %v1219
    %v1222 = vsel %vm249, %v1220, 0
    %1224 = vmatpush.xpose.msra.mxu0 0.0
    %1225 = vmatpush.xpose.msra.mxu0 0.0
    %1226 = vmatpush.xpose.msra.mxu0 0.0
    %1227 = vmatpush.xpose.msra.mxu0 0.0
    %1228 = vmatpush.xpose.msra.mxu0 0.0
    %1229 = vmatpush.xpose.msra.mxu0 0.0
    %1230 = vmatpush.xpose.msra.mxu0 0.0
    %1231 = vmatpush.xpose.msra.mxu0 0.0
    %1232 = vmatpush.xpose.msra.mxu0 0.0
    %1233 = vmatpush.xpose.msra.mxu0 0.0
    %1234 = vmatpush.xpose.msra.mxu0 0.0
    %1235 = vmatpush.xpose.msra.mxu0 0.0
    %1236 = vmatpush.xpose.msra.mxu0 %v718
    %1237 = vmatpush.xpose.msra.mxu0 %v715
    %1238 = vmatpush.xpose.msra.mxu0 %v712
    %1239 = vmatpush.xpose.msra.mxu0 %v709
    %1240 = vmatmul.f32.gmra.mxu0 %v1222
    %v1241 = vpop.f32.mrf.mxu0
    %v1242 = vadd.f32 %v703, %v1241
    %1243 = vdwg.mxu0
    %v1245 = vrot.slane %v1242, 1
    %v1246 = vrot.slane %v1242, 2
    %v1247 = vrot.slane %v1242, 3
    %v1248 = vrot.slane %v1242, 4
    %v1249 = vrot.slane %v1242, 5
    %v1250 = vrot.slane %v1242, 6
    %v1251 = vrot.slane %v1242, 7
    %1259 = vst.msk [vmem:[#allocation14 + $0x1] sm:$0x1] %vm755, %v1242
    %1260 = vst.msk [vmem:[#allocation14 + $0x3] sm:$0x1] %vm755, %v1245
    %1261 = vst.msk [vmem:[#allocation14 + $0x5] sm:$0x1] %vm755, %v1246
    %1262 = vst.msk [vmem:[#allocation14 + $0x7] sm:$0x1] %vm755, %v1247
    %1263 = vst.msk [vmem:[#allocation14 + $0x9] sm:$0x1] %vm755, %v1248
    %1264 = vst.msk [vmem:[#allocation14 + $0xb] sm:$0x1] %vm755, %v1249
    %1265 = vst.msk [vmem:[#allocation14 + $0xd] sm:$0x1] %vm755, %v1250
    %1266 = vst.msk [vmem:[#allocation14 + $0xf] sm:$0x1] %vm755, %v1251
    %v1267 = vmul.f32 %v1195, 0.25
    %s1268 = scalar_lea.vmem [#allocation15], 8
    %1269 = vst.msk [vmem:[%s1268] sm:$0xff] %vm429, %v1267
    // Predicated region
    $region74: #{tpu_custom_call.1} parent=1 // pred_check
      _
    $region75: #{tpu_custom_call.1} parent=1 // pred_check_branch
      %1271 = sbr.rel (0) target = $region77
    $region76: #{tpu_custom_call.1} parent=1 // pred_region
      %1273 = vsyncadd [#allocation4], 0
      %s1274 = sshll.u32 [#allocation14], 4
      %s1275 = int_to_ptr.vmem [resolvable:$true] %s1274
      %s1276 = sshll.u32 %s11, 4
      %s1277 = int_to_ptr.hbm [resolvable:$true] %s1276
      %1282 = dma.vmem_to_hbm [thread:$0]  %s1275, 256, %s1277, [#allocation4], 32, 32, 2
    $region77: #{tpu_custom_call.1} parent=1 // pred_fallthru
      _
    // Predicated region
    $region78: #{tpu_custom_call.1} parent=1 // pred_check
      _
    $region79: #{tpu_custom_call.1} parent=1 // pred_check_branch
      %1284 = sbr.rel (0) target = $region81
    $region80: #{tpu_custom_call.1} parent=1 // pred_region
      %1286 = vsyncadd [#allocation16], 0
      %s1287 = sshll.u32 [#allocation15], 4
      %s1288 = int_to_ptr.vmem [resolvable:$true] %s1287
      %s1289 = sshll.u32 %s12, 4
      %s1290 = int_to_ptr.hbm [resolvable:$true] %s1289
      %1295 = dma.vmem_to_hbm [thread:$0]  %s1288, 256, %s1290, [#allocation16], 128, 128, 8
    $region81: #{tpu_custom_call.1} parent=1 // pred_fallthru
      _
    // Predicated region
    $region82: #{tpu_custom_call.1} parent=1 // pred_check
      _
    $region83: #{tpu_custom_call.1} parent=1 // pred_check_branch
      %1297 = sbr.rel (0) target = $region85
    $region84: #{tpu_custom_call.1} parent=1 // pred_region
      %1299 = dma.done [#allocation4], 256
    $region85: #{tpu_custom_call.1} parent=1 // pred_fallthru
      _
    // Predicated region
    $region86: #{tpu_custom_call.1} parent=1 // pred_check
      _
    $region87: #{tpu_custom_call.1} parent=1 // pred_check_branch
      %1301 = sbr.rel (0) target = $region89
    $region88: #{tpu_custom_call.1} parent=1 // pred_region
      %1303 = dma.done [#allocation16], 256
    $region89: #{tpu_custom_call.1} parent=1 // pred_fallthru
      _
    %1304 = vsyncpa [#allocation3], 1
    %1305 = vsyncpa [#allocation6], 1
    %1306 = vsyncpa [#allocation9], 1
    %1307 = vsyncpa [#allocation12], 1
    %1308 = vsyncpa [#allocation4], 1
    %1309 = vsyncpa [#allocation16], 1

</llo_original>
